<compile_context>
chip_gen: v7x
topology: tpu7x:2x2x1
jax: 0.10.0
libtpu: 0.0.40
codegen_flags: <defaults>
</compile_context>

<pallas_src>
import functools

import jax
import jax.numpy as jnp
from jax.experimental import pallas as pl
from jax.experimental.pallas import tpu as pltpu


_VMEM_LIMIT_BYTES = 32 * 1024 * 1024   # explicit scoped-VMEM limit (OK on v5e/v6e/v7x)
_MM_VMEM_BUDGET = 24 * 1024 * 1024     # target working set, projection / head matmul
_REC_VMEM_BUDGET = 20 * 1024 * 1024    # target working set, recurrence kernel


# ----------------------------------------------------------------------------
# Tiling helpers (VMEM / vreg budget aware)
# ----------------------------------------------------------------------------
def _pick_col_tile(dout):
    """Dout (lane-axis) tile for the projection/head matmul."""
    if dout <= 512 or dout % 128 != 0:
        return dout            # block == full dim is always legal
    return 512


def _pick_row_tile(n, k, tn, out_bytes, budget=_MM_VMEM_BUDGET):
    """Row tile; remainder rows handled by a cdiv grid (partial last block)."""
    if n <= 512:
        return n
    fixed = 2 * (k * tn * 2) + 2 * (tn * 4)          # bf16 weight + f32 bias (dbl-buffered)
    per_row = 2 * (k * 4) + 2 * (tn * out_bytes)     # f32 x + out            (dbl-buffered)
    tr = (budget - fixed) // max(per_row, 1)
    return int(max(8, min(512, (tr // 8) * 8)))


def _pick_batch_tile(b):
    """Two multiple-of-8 batch tiles when possible -> v7x's 2nd core gets half."""
    if b % 16 == 0:
        return b // 2
    return b


def _pick_time_chunk(t, tb, h, budget=_REC_VMEM_BUDGET):
    """Largest divisor of t whose GI/out buffers fit the VMEM budget."""
    w_bytes = 3 * h * h * 2 + 3 * h * 4                      # single-buffered W_hh + bias
    per_t = 2 * (tb * 3 * h * 2) + 2 * (tb * h * 4)          # GI (bf16) + out (f32), dbl-buf
    cap = int(max(1, min(t, 64, (budget - w_bytes) // max(per_t, 1))))
    for tc in range(cap, 0, -1):
        if t % tc == 0:
            return tc
    return 1


def _pick_unroll(tc, tb, h):
    """Unroll only while the per-timestep working set fits comfortably in vregs."""
    per_step = 10 * tb * h * 4        # ~live f32 temporaries per timestep
    return int(max(1, min(tc, (128 * 1024) // max(per_step, 1))))


def _invariant_spec(block_shape, index_map):
    """BlockSpec for a grid-invariant input: request single buffering (the
    default double-buffer only wastes VMEM on a tensor that is DMA'd once)."""
    try:
        return pl.BlockSpec(block_shape, index_map, pipeline_mode=pl.Buffered(1))
    except (TypeError, AttributeError):   # API without pipeline_mode support
        return pl.BlockSpec(block_shape, index_map)


# ----------------------------------------------------------------------------
# Pallas kernels
# ----------------------------------------------------------------------------
def matmul_bias_kernel(x_ref, w_ref, b_ref, o_ref):
    """(TR, K) @ (K, TN) + (1, TN); bf16 MXU operands, f32 accumulation."""
    x = x_ref[...].astype(jnp.bfloat16)
    acc = jnp.dot(x, w_ref[...], preferred_element_type=jnp.float32)
    o_ref[...] = (acc + b_ref[...]).astype(o_ref.dtype)


def gru_rec_kernel(gi_ref, whh_ref, bhh_ref, out_ref, h_ref, *, tc, hidden, unroll):
    """GRU recurrence over one (batch tile, time chunk).

    gi_ref : (Tc, Tb, 3H) bf16  x @ W_ih with b_ih and the r/z parts of b_hh
                                folded in (gate order r, z, n).
    whh_ref: (H, 3H)      bf16  gate-concatenated hidden weights (h @ W).
    bhh_ref: (1, 3H)      f32   [0, 0, b_hh_n] (n-gate bias sits inside r*..).
    out_ref: (Tc, Tb, H)  f32   hidden states for this chunk.
    h_ref  : (Tb, H)      f32   VMEM carry, persists across sequential steps.
    """
    @pl.when(pl.program_id(1) == 0)            # new batch tile -> h0 = 0
    def _():
        h_ref[...] = jnp.zeros_like(h_ref)

    # Hoisted out of the time loop.
    w = whh_ref[...]                                                    # (H, 3H)
    b3 = jnp.broadcast_to(bhh_ref[...], (h_ref.shape[0], 3 * hidden))   # (Tb, 3H)

    def step(i, h):
        gi = gi_ref[i].astype(jnp.float32)                              # (Tb, 3H)
        # ONE fused MXU matmul per timestep instead of three per-gate ones.
        gh = jnp.dot(h.astype(jnp.bfloat16), w,
                     preferred_element_type=jnp.float32) + b3           # (Tb, 3H)
        # Gate math stays f32 (v5e VPU/EUP have no bf16 path).
        rz = jax.nn.sigmoid(gi[:, :2 * hidden] + gh[:, :2 * hidden])
        r = rz[:, :hidden]
        z = rz[:, hidden:]
        n = jnp.tanh(gi[:, 2 * hidden:] + r * gh[:, 2 * hidden:])
        h_new = n + z * (h - n)                  # == (1 - z) * n + z * h
        out_ref[i] = h_new.astype(out_ref.dtype)
        return h_new

    h_ref[...] = jax.lax.fori_loop(0, tc, step, h_ref[...], unroll=unroll)


# ----------------------------------------------------------------------------
# Wrappers
# ----------------------------------------------------------------------------
def matmul_bias(x, w, b, out_dtype=jnp.float32):
    """(N, K) @ (K, Dout) + (1, Dout), tiled over rows and Dout."""
    n, k = x.shape
    dout = w.shape[1]
    tn = _pick_col_tile(dout)
    tr = _pick_row_tile(n, k, tn, jnp.dtype(out_dtype).itemsize)
    # Dout axis first, rows fastest -> each weight panel is reused across all
    # row tiles (unchanged block index => DMA skipped); both axes parallel.
    grid = (pl.cdiv(dout, tn), pl.cdiv(n, tr))
    return pl.pallas_call(
        matmul_bias_kernel,
        out_shape=jax.ShapeDtypeStruct((n, dout), out_dtype),
        grid=grid,
        in_specs=[
            pl.BlockSpec((tr, k), lambda j, i: (i, 0)),
            pl.BlockSpec((k, tn), lambda j, i: (0, j)),
            pl.BlockSpec((1, tn), lambda j, i: (0, j)),
        ],
        out_specs=pl.BlockSpec((tr, tn), lambda j, i: (i, j)),
        compiler_params=pltpu.CompilerParams(
            dimension_semantics=("parallel", "parallel"),
            vmem_limit_bytes=_VMEM_LIMIT_BYTES),
    )(x, w.astype(jnp.bfloat16), b)


def gru_recurrence(gi, w_hh, b_hh_n):
    """gi: (T, B, 3H) bf16, w_hh: (H, 3H), b_hh_n: (1, H) -> (T, B, H) f32."""
    t, b, three_h = gi.shape
    h = three_h // 3
    tb = _pick_batch_tile(b)
    tc = _pick_time_chunk(t, tb, h)
    unroll = _pick_unroll(tc, tb, h)
    bhh3 = jnp.concatenate(
        [jnp.zeros((1, 2 * h), jnp.float32), b_hh_n.astype(jnp.float32)], axis=1)
    kernel = functools.partial(gru_rec_kernel, tc=tc, hidden=h, unroll=unroll)
    return pl.pallas_call(
        kernel,
        out_shape=jax.ShapeDtypeStruct((t, b, h), jnp.float32),
        grid=(b // tb, t // tc),
        in_specs=[
            pl.BlockSpec((tc, tb, three_h), lambda bi, ti: (ti, bi, 0)),
            _invariant_spec((h, three_h), lambda bi, ti: (0, 0)),
            _invariant_spec((1, three_h), lambda bi, ti: (0, 0)),
        ],
        out_specs=pl.BlockSpec((tc, tb, h), lambda bi, ti: (ti, bi, 0)),
        scratch_shapes=[pltpu.VMEM((tb, h), jnp.float32)],
        compiler_params=pltpu.CompilerParams(
            dimension_semantics=("parallel", "arbitrary"),  # batch || , time seq
            vmem_limit_bytes=_VMEM_LIMIT_BYTES),
    )(gi, w_hh.astype(jnp.bfloat16), bhh3)


def gru_layer(x_tm, w_ih, w_hh, b_ih, b_hh):
    """One GRU layer.  x_tm: (T, B, Din) time-major -> (T, B, H) time-major."""
    t, b, din = x_tm.shape
    hidden = w_hh.shape[0]
    # Fold b_ih and the r/z parts of b_hh into the one-shot input projection.
    bias = b_ih + jnp.concatenate(
        [b_hh[:, :2 * hidden], jnp.zeros((1, hidden), jnp.float32)], axis=1)
    gi = matmul_bias(x_tm.reshape(t * b, din), w_ih, bias,
                     out_dtype=jnp.bfloat16)        # (T*B, 3H) bf16
    gi = gi.reshape(t, b, 3 * hidden)               # contiguous -> no transpose
    return gru_recurrence(gi, w_hh, b_hh[:, 2 * hidden:])


def gru_model_forward(x, params):
    """x: (B, T, input_size) batch-first.  Returns (B, T, input_size)."""
    h = jnp.transpose(x, (1, 0, 2))                 # time-major (T, B, Din)
    for layer in params["gru_layers"]:
        h = gru_layer(h, *layer)
    t, b, hidden = h.shape
    out = matmul_bias(h.reshape(t * b, hidden), params["fc_w"], params["fc_b"],
                      out_dtype=jnp.float32).reshape(t, b, -1)
    return jnp.transpose(out, (1, 0, 2))            # back to batch-first


# ----------------------------------------------------------------------------
# Pure-JAX reference.  With mxu_dtype/gi_dtype = bf16 it mirrors the kernels'
# mixed-precision choices exactly (f32 accumulation, f32 carry); with the
# defaults it is exact f32 nn.GRU(batch_first) + nn.Linear semantics.
# ----------------------------------------------------------------------------
def gru_reference(x, params, mxu_dtype=jnp.float32, gi_dtype=jnp.float32):
    def mm(a, w):
        return jnp.dot(a.astype(mxu_dtype), w.astype(mxu_dtype),
                       preferred_element_type=jnp.float32)

    b_sz, t_len, _ = x.shape
    seq = x
    for (w_ih, w_hh, b_ih, b_hh) in params["gru_layers"]:
        hidden = w_hh.shape[0]
        bias = b_ih + jnp.concatenate(
            [b_hh[:, :2 * hidden], jnp.zeros((1, hidden), jnp.float32)], axis=1)
        gi = (mm(seq.reshape(b_sz * t_len, -1), w_ih) + bias).astype(gi_dtype)
        gi = gi.reshape(b_sz, t_len, 3 * hidden)
        bhh3 = jnp.concatenate(
            [jnp.zeros((1, 2 * hidden), jnp.float32), b_hh[:, 2 * hidden:]], axis=1)
        h = jnp.zeros((b_sz, hidden), jnp.float32)
        outs = []
        for t in range(t_len):
            gi_t = gi[:, t, :].astype(jnp.float32)
            gh = mm(h, w_hh) + bhh3
            rz = jax.nn.sigmoid(gi_t[:, :2 * hidden] + gh[:, :2 * hidden])
            r, z = rz[:, :hidden], rz[:, hidden:]
            n = jnp.tanh(gi_t[:, 2 * hidden:] + r * gh[:, 2 * hidden:])
            h = n + z * (h - n)
            outs.append(h)
        seq = jnp.stack(outs, axis=1)
    out = mm(seq.reshape(b_sz * t_len, -1), params["fc_w"]) + params["fc_b"]
    return out.reshape(b_sz, t_len, -1)


# ----------------------------------------------------------------------------
# Deterministic parameter init (nn.GRU / nn.Linear uniform +-1/sqrt(H) shapes).
# Gate order is PyTorch's (r, z, n).  To import real PyTorch weights:
#   w_ih = weight_ih_l{k}.T (Din, 3H), w_hh = weight_hh_l{k}.T (H, 3H),
#   biases reshaped to (1, 3H); fc_w = fc.weight.T, fc_b = fc.bias[None, :].
# ----------------------------------------------------------------------------
def init_params(key, input_size, hidden_size, num_layers):
    bound = hidden_size ** -0.5
    layers = []
    for layer in range(num_layers):
        din = input_size if layer == 0 else hidden_size
        key, k1, k2, k3, k4 = jax.random.split(key, 5)
        w_ih = jax.random.uniform(k1, (din, 3 * hidden_size), jnp.float32,
                                  -bound, bound)
        w_hh = jax.random.uniform(k2, (hidden_size, 3 * hidden_size), jnp.float32,
                                  -bound, bound)
        b_ih = jax.random.uniform(k3, (1, 3 * hidden_size), jnp.float32,
                                  -bound, bound)
        b_hh = jax.random.uniform(k4, (1, 3 * hidden_size), jnp.float32,
                                  -bound, bound)
        layers.append((w_ih, w_hh, b_ih, b_hh))
    key, k5, k6 = jax.random.split(key, 3)
    fc_w = jax.random.uniform(k5, (hidden_size, input_size), jnp.float32,
                              -bound, bound)
    fc_b = jax.random.uniform(k6, (1, input_size), jnp.float32, -bound, bound)
    return {"gru_layers": layers, "fc_w": fc_w, "fc_b": fc_b}


if __name__ == "__main__":
    B, T = 2, 8
    INPUT_SIZE, HIDDEN_SIZE, NUM_LAYERS = 16, 32, 2

    key = jax.random.PRNGKey(0)
    key, kx = jax.random.split(key)
    x = jax.random.normal(kx, (B, T, INPUT_SIZE), jnp.float32)
    params = init_params(key, INPUT_SIZE, HIDDEN_SIZE, NUM_LAYERS)

    out = jax.block_until_ready(jax.jit(gru_model_forward)(x, params))
    assert out.shape == (B, T, INPUT_SIZE)

    # Mixed-precision-matched reference (same bf16-operand / f32-accumulation
    # choices as the kernels) -> tight tolerance.
    ref_mp = gru_reference(x, params, mxu_dtype=jnp.bfloat16, gi_dtype=jnp.bfloat16)
    assert jnp.allclose(out, ref_mp, rtol=1e-2, atol=1e-2), \
        "mismatch vs mixed-precision reference"

    # Exact f32 nn.GRU semantics -> tolerance sized for bf16 MXU operands.
    ref_f32 = gru_reference(x, params)
    assert jnp.allclose(out, ref_f32, rtol=5e-2, atol=5e-2), \
        "mismatch vs f32 reference"

    print("KERNEL_OK")
</pallas_src>

<mosaic_0001>
module attributes {stable_mosaic.version = 11 : i64} {
  func.func @matmul_bias_kernel(%arg0: i32, %arg1: i32, %arg2: memref<16x16xf32, #tpu.memory_space<vmem>>, %arg3: memref<16x96xbf16, #tpu.memory_space<vmem>>, %arg4: memref<1x96xf32, #tpu.memory_space<vmem>>, %arg5: memref<16x96xbf16, #tpu.memory_space<vmem>>) attributes {dimension_semantics = [#tpu.dimension_semantics<parallel>, #tpu.dimension_semantics<parallel>], iteration_bounds = array<i64: 1, 1>, scalar_prefetch = 0 : i64, scratch_operands = 0 : i64, tpu.core_type = #tpu.core_type<tc>, window_params = [{transform_indices = @transform_0, window_bounds = array<i64: 16, 16>}, {transform_indices = @transform_1, window_bounds = array<i64: 16, 96>}, {transform_indices = @transform_2, window_bounds = array<i64: 1, 96>}, {transform_indices = @transform_3, window_bounds = array<i64: 16, 96>}]} {
    %c0 = arith.constant 0 : index
    %c0_0 = arith.constant 0 : index
    %0 = vector.load %arg2[%c0, %c0_0] : memref<16x16xf32, #tpu.memory_space<vmem>>, vector<16x16xf32>
    %1 = arith.truncf %0 : vector<16x16xf32> to vector<16x16xbf16>
    %c0_1 = arith.constant 0 : index
    %c0_2 = arith.constant 0 : index
    %2 = vector.load %arg3[%c0_1, %c0_2] : memref<16x96xbf16, #tpu.memory_space<vmem>>, vector<16x96xbf16>
    %cst = arith.constant dense<0.000000e+00> : vector<16x96xf32>
    %3 = tpu.matmul %1, %2, %cst {dimension_numbers = #tpu.dot_dimension_numbers<[1], [0], [0], [1], [0, 0, 1, 1], [], []>} : vector<16x16xbf16>, vector<16x96xbf16>, vector<16x96xf32> -> vector<16x96xf32>
    %c0_3 = arith.constant 0 : index
    %c0_4 = arith.constant 0 : index
    %4 = vector.load %arg4[%c0_3, %c0_4] : memref<1x96xf32, #tpu.memory_space<vmem>>, vector<1x96xf32>
    %5 = vector.broadcast %4 : vector<1x96xf32> to vector<16x96xf32>
    %6 = arith.addf %3, %5 : vector<16x96xf32>
    %7 = arith.truncf %6 : vector<16x96xf32> to vector<16x96xbf16>
    %c0_5 = arith.constant 0 : index
    %c0_6 = arith.constant 0 : index
    %8 = vector.load %arg5[%c0_5, %c0_6] : memref<16x96xbf16, #tpu.memory_space<vmem>>, vector<16x96xbf16>
    tpu.vector_store %arg5[%c0_5, %c0_6], %7 {strides = array<i32>} : memref<16x96xbf16, #tpu.memory_space<vmem>>, vector<16x96xbf16>,
    return
  }
  func.func @transform_0(%arg0: i32, %arg1: i32) -> (i32, i32) {
    %c0_i32 = arith.constant 0 : i32
    %c0_i32_0 = arith.constant 0 : i32
    return %arg1, %c0_i32 : i32, i32
  }
  func.func @transform_1(%arg0: i32, %arg1: i32) -> (i32, i32) {
    %c0_i32 = arith.constant 0 : i32
    %c0_i32_0 = arith.constant 0 : i32
    return %c0_i32, %arg0 : i32, i32
  }
  func.func @transform_2(%arg0: i32, %arg1: i32) -> (i32, i32) {
    %c0_i32 = arith.constant 0 : i32
    %c0_i32_0 = arith.constant 0 : i32
    return %c0_i32, %arg0 : i32, i32
  }
  func.func @transform_3(%arg0: i32, %arg1: i32) -> (i32, i32) {
    %c0_i32 = arith.constant 0 : i32
    return %arg1, %arg0 : i32, i32
  }
}

module attributes {stable_mosaic.version = 11 : i64} {
  func.func @matmul_bias_kernel(%arg0: i32, %arg1: i32, %arg2: memref<16x32xf32, #tpu.memory_space<vmem>>, %arg3: memref<32x96xbf16, #tpu.memory_space<vmem>>, %arg4: memref<1x96xf32, #tpu.memory_space<vmem>>, %arg5: memref<16x96xbf16, #tpu.memory_space<vmem>>) attributes {dimension_semantics = [#tpu.dimension_semantics<parallel>, #tpu.dimension_semantics<parallel>], iteration_bounds = array<i64: 1, 1>, scalar_prefetch = 0 : i64, scratch_operands = 0 : i64, tpu.core_type = #tpu.core_type<tc>, window_params = [{transform_indices = @transform_0, window_bounds = array<i64: 16, 32>}, {transform_indices = @transform_1, window_bounds = array<i64: 32, 96>}, {transform_indices = @transform_2, window_bounds = array<i64: 1, 96>}, {transform_indices = @transform_3, window_bounds = array<i64: 16, 96>}]} {
    %c0 = arith.constant 0 : index
    %c0_0 = arith.constant 0 : index
    %0 = vector.load %arg2[%c0, %c0_0] : memref<16x32xf32, #tpu.memory_space<vmem>>, vector<16x32xf32>
    %1 = arith.truncf %0 : vector<16x32xf32> to vector<16x32xbf16>
    %c0_1 = arith.constant 0 : index
    %c0_2 = arith.constant 0 : index
    %2 = vector.load %arg3[%c0_1, %c0_2] : memref<32x96xbf16, #tpu.memory_space<vmem>>, vector<32x96xbf16>
    %cst = arith.constant dense<0.000000e+00> : vector<16x96xf32>
    %3 = tpu.matmul %1, %2, %cst {dimension_numbers = #tpu.dot_dimension_numbers<[1], [0], [0], [1], [0, 0, 1, 1], [], []>} : vector<16x32xbf16>, vector<32x96xbf16>, vector<16x96xf32> -> vector<16x96xf32>
    %c0_3 = arith.constant 0 : index
    %c0_4 = arith.constant 0 : index
    %4 = vector.load %arg4[%c0_3, %c0_4] : memref<1x96xf32, #tpu.memory_space<vmem>>, vector<1x96xf32>
    %5 = vector.broadcast %4 : vector<1x96xf32> to vector<16x96xf32>
    %6 = arith.addf %3, %5 : vector<16x96xf32>
    %7 = arith.truncf %6 : vector<16x96xf32> to vector<16x96xbf16>
    %c0_5 = arith.constant 0 : index
    %c0_6 = arith.constant 0 : index
    %8 = vector.load %arg5[%c0_5, %c0_6] : memref<16x96xbf16, #tpu.memory_space<vmem>>, vector<16x96xbf16>
    tpu.vector_store %arg5[%c0_5, %c0_6], %7 {strides = array<i32>} : memref<16x96xbf16, #tpu.memory_space<vmem>>, vector<16x96xbf16>,
    return
  }
  func.func @transform_0(%arg0: i32, %arg1: i32) -> (i32, i32) {
    %c0_i32 = arith.constant 0 : i32
    %c0_i32_0 = arith.constant 0 : i32
    return %arg1, %c0_i32 : i32, i32
  }
  func.func @transform_1(%arg0: i32, %arg1: i32) -> (i32, i32) {
    %c0_i32 = arith.constant 0 : i32
    %c0_i32_0 = arith.constant 0 : i32
    return %c0_i32, %arg0 : i32, i32
  }
  func.func @transform_2(%arg0: i32, %arg1: i32) -> (i32, i32) {
    %c0_i32 = arith.constant 0 : i32
    %c0_i32_0 = arith.constant 0 : i32
    return %c0_i32, %arg0 : i32, i32
  }
  func.func @transform_3(%arg0: i32, %arg1: i32) -> (i32, i32) {
    %c0_i32 = arith.constant 0 : i32
    return %arg1, %arg0 : i32, i32
  }
}

module attributes {stable_mosaic.version = 11 : i64} {
  func.func @gru_rec_kernel(%arg0: i32, %arg1: i32, %arg2: memref<8x2x96xbf16, #tpu.memory_space<vmem>>, %arg3: memref<32x96xbf16, #tpu.memory_space<vmem>>, %arg4: memref<1x96xf32, #tpu.memory_space<vmem>>, %arg5: memref<8x2x32xf32, #tpu.memory_space<vmem>>, %arg6: memref<2x32xf32, #tpu.memory_space<vmem>>) attributes {dimension_semantics = [#tpu.dimension_semantics<parallel>, #tpu.dimension_semantics<arbitrary>], iteration_bounds = array<i64: 1, 1>, scalar_prefetch = 0 : i64, scratch_operands = 1 : i64, tpu.core_type = #tpu.core_type<tc>, window_params = [{transform_indices = @transform_0, window_bounds = array<i64: 8, 2, 96>}, {pipeline_mode = #tpu.pipeline_mode<synchronous>, transform_indices = @transform_1, window_bounds = array<i64: 32, 96>}, {pipeline_mode = #tpu.pipeline_mode<synchronous>, transform_indices = @transform_2, window_bounds = array<i64: 1, 96>}, {transform_indices = @transform_3, window_bounds = array<i64: 8, 2, 32>}]} {
    %c0_i32 = arith.constant 0 : i32
    %0 = arith.cmpi eq, %arg1, %c0_i32 : i32
    %1 = arith.extui %0 : i1 to i32
    %c0_i32_0 = arith.constant 0 : i32
    %2 = arith.cmpi ne, %1, %c0_i32_0 : i32
    scf.if %2 {
      %cst_56 = arith.constant 0.000000e+00 : f32
      %241 = vector.broadcast %cst_56 : f32 to vector<2x32xf32>
      %c0_57 = arith.constant 0 : index
      %c0_58 = arith.constant 0 : index
      %242 = vector.load %arg6[%c0_57, %c0_58] : memref<2x32xf32, #tpu.memory_space<vmem>>, vector<2x32xf32>
      tpu.vector_store %arg6[%c0_57, %c0_58], %241 {strides = array<i32>} : memref<2x32xf32, #tpu.memory_space<vmem>>, vector<2x32xf32>,
    } else {
    }
    %c0 = arith.constant 0 : index
    %c0_1 = arith.constant 0 : index
    %3 = vector.load %arg3[%c0, %c0_1] : memref<32x96xbf16, #tpu.memory_space<vmem>>, vector<32x96xbf16>
    %c0_2 = arith.constant 0 : index
    %c0_3 = arith.constant 0 : index
    %4 = vector.load %arg4[%c0_2, %c0_3] : memref<1x96xf32, #tpu.memory_space<vmem>>, vector<1x96xf32>
    %5 = vector.shape_cast %4 : vector<1x96xf32> to vector<1x96xf32>
    %6 = vector.broadcast %5 : vector<1x96xf32> to vector<2x96xf32>
    %c0_4 = arith.constant 0 : index
    %c0_5 = arith.constant 0 : index
    %7 = vector.load %arg6[%c0_4, %c0_5] : memref<2x32xf32, #tpu.memory_space<vmem>>, vector<2x32xf32>
    %c0_i32_6 = arith.constant 0 : i32
    %8 = arith.index_cast %c0_i32_6 : i32 to index
    %c0_7 = arith.constant 0 : index
    %c0_8 = arith.constant 0 : index
    %9 = vector.load %arg2[%8, %c0_7, %c0_8] : memref<8x2x96xbf16, #tpu.memory_space<vmem>>, vector<1x2x96xbf16>
    %10 = vector.shape_cast %9 : vector<1x2x96xbf16> to vector<2x96xbf16>
    %11 = arith.extf %10 : vector<2x96xbf16> to vector<2x96xf32>
    %12 = arith.truncf %7 : vector<2x32xf32> to vector<2x32xbf16>
    %cst = arith.constant dense<0.000000e+00> : vector<2x96xf32>
    %13 = tpu.matmul %12, %3, %cst {dimension_numbers = #tpu.dot_dimension_numbers<[1], [0], [0], [1], [0, 0, 1, 1], [], []>} : vector<2x32xbf16>, vector<32x96xbf16>, vector<2x96xf32> -> vector<2x96xf32>
    %14 = arith.addf %13, %6 : vector<2x96xf32>
    %15 = vector.extract_strided_slice %11 {offsets = [0, 0], sizes = [2, 64], strides = [1, 1]} : vector<2x96xf32> to vector<2x64xf32>
    %16 = vector.extract_strided_slice %14 {offsets = [0, 0], sizes = [2, 64], strides = [1, 1]} : vector<2x96xf32> to vector<2x64xf32>
    %17 = arith.addf %15, %16 : vector<2x64xf32>
    %18 = arith.negf %17 : vector<2x64xf32>
    %19 = math.exp %18 : vector<2x64xf32>
    %cst_9 = arith.constant 1.000000e+00 : f32
    %20 = vector.broadcast %cst_9 : f32 to vector<2x64xf32>
    %21 = arith.addf %20, %19 : vector<2x64xf32>
    %22 = arith.divf %20, %21 : vector<2x64xf32>
    %23 = vector.extract_strided_slice %22 {offsets = [0, 0], sizes = [2, 32], strides = [1, 1]} : vector<2x64xf32> to vector<2x32xf32>
    %24 = vector.extract_strided_slice %22 {offsets = [0, 32], sizes = [2, 32], strides = [1, 1]} : vector<2x64xf32> to vector<2x32xf32>
    %25 = vector.extract_strided_slice %11 {offsets = [0, 64], sizes = [2, 32], strides = [1, 1]} : vector<2x96xf32> to vector<2x32xf32>
    %26 = vector.extract_strided_slice %14 {offsets = [0, 64], sizes = [2, 32], strides = [1, 1]} : vector<2x96xf32> to vector<2x32xf32>
    %27 = arith.mulf %23, %26 : vector<2x32xf32>
    %28 = arith.addf %25, %27 : vector<2x32xf32>
    %29 = math.tanh %28 : vector<2x32xf32>
    %30 = arith.subf %7, %29 : vector<2x32xf32>
    %31 = arith.mulf %24, %30 : vector<2x32xf32>
    %32 = arith.addf %29, %31 : vector<2x32xf32>
    %33 = arith.index_cast %c0_i32_6 : i32 to index
    %c0_10 = arith.constant 0 : index
    %c0_11 = arith.constant 0 : index
    %34 = vector.load %arg5[%33, %c0_10, %c0_11] : memref<8x2x32xf32, #tpu.memory_space<vmem>>, vector<1x2x32xf32>
    %35 = vector.shape_cast %34 : vector<1x2x32xf32> to vector<2x32xf32>
    %36 = vector.shape_cast %32 : vector<2x32xf32> to vector<1x2x32xf32>
    tpu.vector_store %arg5[%33, %c0_10, %c0_11], %36 {strides = array<i32>} : memref<8x2x32xf32, #tpu.memory_space<vmem>>, vector<1x2x32xf32>,
    %c1_i32 = arith.constant 1 : i32
    %37 = arith.index_cast %c1_i32 : i32 to index
    %c0_12 = arith.constant 0 : index
    %c0_13 = arith.constant 0 : index
    %38 = vector.load %arg2[%37, %c0_12, %c0_13] : memref<8x2x96xbf16, #tpu.memory_space<vmem>>, vector<1x2x96xbf16>
    %39 = vector.shape_cast %38 : vector<1x2x96xbf16> to vector<2x96xbf16>
    %40 = arith.extf %39 : vector<2x96xbf16> to vector<2x96xf32>
    %41 = arith.truncf %32 : vector<2x32xf32> to vector<2x32xbf16>
    %cst_14 = arith.constant dense<0.000000e+00> : vector<2x96xf32>
    %42 = tpu.matmul %41, %3, %cst_14 {dimension_numbers = #tpu.dot_dimension_numbers<[1], [0], [0], [1], [0, 0, 1, 1], [], []>} : vector<2x32xbf16>, vector<32x96xbf16>, vector<2x96xf32> -> vector<2x96xf32>
    %43 = arith.addf %42, %6 : vector<2x96xf32>
    %44 = vector.extract_strided_slice %40 {offsets = [0, 0], sizes = [2, 64], strides = [1, 1]} : vector<2x96xf32> to vector<2x64xf32>
    %45 = vector.extract_strided_slice %43 {offsets = [0, 0], sizes = [2, 64], strides = [1, 1]} : vector<2x96xf32> to vector<2x64xf32>
    %46 = arith.addf %44, %45 : vector<2x64xf32>
    %47 = arith.negf %46 : vector<2x64xf32>
    %48 = math.exp %47 : vector<2x64xf32>
    %cst_15 = arith.constant 1.000000e+00 : f32
    %49 = vector.broadcast %cst_15 : f32 to vector<2x64xf32>
    %50 = arith.addf %49, %48 : vector<2x64xf32>
    %51 = arith.divf %49, %50 : vector<2x64xf32>
    %52 = vector.extract_strided_slice %51 {offsets = [0, 0], sizes = [2, 32], strides = [1, 1]} : vector<2x64xf32> to vector<2x32xf32>
    %53 = vector.extract_strided_slice %51 {offsets = [0, 32], sizes = [2, 32], strides = [1, 1]} : vector<2x64xf32> to vector<2x32xf32>
    %54 = vector.extract_strided_slice %40 {offsets = [0, 64], sizes = [2, 32], strides = [1, 1]} : vector<2x96xf32> to vector<2x32xf32>
    %55 = vector.extract_strided_slice %43 {offsets = [0, 64], sizes = [2, 32], strides = [1, 1]} : vector<2x96xf32> to vector<2x32xf32>
    %56 = arith.mulf %52, %55 : vector<2x32xf32>
    %57 = arith.addf %54, %56 : vector<2x32xf32>
    %58 = math.tanh %57 : vector<2x32xf32>
    %59 = arith.subf %32, %58 : vector<2x32xf32>
    %60 = arith.mulf %53, %59 : vector<2x32xf32>
    %61 = arith.addf %58, %60 : vector<2x32xf32>
    %62 = arith.index_cast %c1_i32 : i32 to index
    %c0_16 = arith.constant 0 : index
    %c0_17 = arith.constant 0 : index
    %63 = vector.load %arg5[%62, %c0_16, %c0_17] : memref<8x2x32xf32, #tpu.memory_space<vmem>>, vector<1x2x32xf32>
    %64 = vector.shape_cast %63 : vector<1x2x32xf32> to vector<2x32xf32>
    %65 = vector.shape_cast %61 : vector<2x32xf32> to vector<1x2x32xf32>
    tpu.vector_store %arg5[%62, %c0_16, %c0_17], %65 {strides = array<i32>} : memref<8x2x32xf32, #tpu.memory_space<vmem>>, vector<1x2x32xf32>,
    %c2_i32 = arith.constant 2 : i32
    %66 = arith.index_cast %c2_i32 : i32 to index
    %c0_18 = arith.constant 0 : index
    %c0_19 = arith.constant 0 : index
    %67 = vector.load %arg2[%66, %c0_18, %c0_19] : memref<8x2x96xbf16, #tpu.memory_space<vmem>>, vector<1x2x96xbf16>
    %68 = vector.shape_cast %67 : vector<1x2x96xbf16> to vector<2x96xbf16>
    %69 = arith.extf %68 : vector<2x96xbf16> to vector<2x96xf32>
    %70 = arith.truncf %61 : vector<2x32xf32> to vector<2x32xbf16>
    %cst_20 = arith.constant dense<0.000000e+00> : vector<2x96xf32>
    %71 = tpu.matmul %70, %3, %cst_20 {dimension_numbers = #tpu.dot_dimension_numbers<[1], [0], [0], [1], [0, 0, 1, 1], [], []>} : vector<2x32xbf16>, vector<32x96xbf16>, vector<2x96xf32> -> vector<2x96xf32>
    %72 = arith.addf %71, %6 : vector<2x96xf32>
    %73 = vector.extract_strided_slice %69 {offsets = [0, 0], sizes = [2, 64], strides = [1, 1]} : vector<2x96xf32> to vector<2x64xf32>
    %74 = vector.extract_strided_slice %72 {offsets = [0, 0], sizes = [2, 64], strides = [1, 1]} : vector<2x96xf32> to vector<2x64xf32>
    %75 = arith.addf %73, %74 : vector<2x64xf32>
    %76 = arith.negf %75 : vector<2x64xf32>
    %77 = math.exp %76 : vector<2x64xf32>
    %cst_21 = arith.constant 1.000000e+00 : f32
    %78 = vector.broadcast %cst_21 : f32 to vector<2x64xf32>
    %79 = arith.addf %78, %77 : vector<2x64xf32>
    %80 = arith.divf %78, %79 : vector<2x64xf32>
    %81 = vector.extract_strided_slice %80 {offsets = [0, 0], sizes = [2, 32], strides = [1, 1]} : vector<2x64xf32> to vector<2x32xf32>
    %82 = vector.extract_strided_slice %80 {offsets = [0, 32], sizes = [2, 32], strides = [1, 1]} : vector<2x64xf32> to vector<2x32xf32>
    %83 = vector.extract_strided_slice %69 {offsets = [0, 64], sizes = [2, 32], strides = [1, 1]} : vector<2x96xf32> to vector<2x32xf32>
    %84 = vector.extract_strided_slice %72 {offsets = [0, 64], sizes = [2, 32], strides = [1, 1]} : vector<2x96xf32> to vector<2x32xf32>
    %85 = arith.mulf %81, %84 : vector<2x32xf32>
    %86 = arith.addf %83, %85 : vector<2x32xf32>
    %87 = math.tanh %86 : vector<2x32xf32>
    %88 = arith.subf %61, %87 : vector<2x32xf32>
    %89 = arith.mulf %82, %88 : vector<2x32xf32>
    %90 = arith.addf %87, %89 : vector<2x32xf32>
    %91 = arith.index_cast %c2_i32 : i32 to index
    %c0_22 = arith.constant 0 : index
    %c0_23 = arith.constant 0 : index
    %92 = vector.load %arg5[%91, %c0_22, %c0_23] : memref<8x2x32xf32, #tpu.memory_space<vmem>>, vector<1x2x32xf32>
    %93 = vector.shape_cast %92 : vector<1x2x32xf32> to vector<2x32xf32>
    %94 = vector.shape_cast %90 : vector<2x32xf32> to vector<1x2x32xf32>
    tpu.vector_store %arg5[%91, %c0_22, %c0_23], %94 {strides = array<i32>} : memref<8x2x32xf32, #tpu.memory_space<vmem>>, vector<1x2x32xf32>,
    %c3_i32 = arith.constant 3 : i32
    %95 = arith.index_cast %c3_i32 : i32 to index
    %c0_24 = arith.constant 0 : index
    %c0_25 = arith.constant 0 : index
    %96 = vector.load %arg2[%95, %c0_24, %c0_25] : memref<8x2x96xbf16, #tpu.memory_space<vmem>>, vector<1x2x96xbf16>
    %97 = vector.shape_cast %96 : vector<1x2x96xbf16> to vector<2x96xbf16>
    %98 = arith.extf %97 : vector<2x96xbf16> to vector<2x96xf32>
    %99 = arith.truncf %90 : vector<2x32xf32> to vector<2x32xbf16>
    %cst_26 = arith.constant dense<0.000000e+00> : vector<2x96xf32>
    %100 = tpu.matmul %99, %3, %cst_26 {dimension_numbers = #tpu.dot_dimension_numbers<[1], [0], [0], [1], [0, 0, 1, 1], [], []>} : vector<2x32xbf16>, vector<32x96xbf16>, vector<2x96xf32> -> vector<2x96xf32>
    %101 = arith.addf %100, %6 : vector<2x96xf32>
    %102 = vector.extract_strided_slice %98 {offsets = [0, 0], sizes = [2, 64], strides = [1, 1]} : vector<2x96xf32> to vector<2x64xf32>
    %103 = vector.extract_strided_slice %101 {offsets = [0, 0], sizes = [2, 64], strides = [1, 1]} : vector<2x96xf32> to vector<2x64xf32>
    %104 = arith.addf %102, %103 : vector<2x64xf32>
    %105 = arith.negf %104 : vector<2x64xf32>
    %106 = math.exp %105 : vector<2x64xf32>
    %cst_27 = arith.constant 1.000000e+00 : f32
    %107 = vector.broadcast %cst_27 : f32 to vector<2x64xf32>
    %108 = arith.addf %107, %106 : vector<2x64xf32>
    %109 = arith.divf %107, %108 : vector<2x64xf32>
    %110 = vector.extract_strided_slice %109 {offsets = [0, 0], sizes = [2, 32], strides = [1, 1]} : vector<2x64xf32> to vector<2x32xf32>
    %111 = vector.extract_strided_slice %109 {offsets = [0, 32], sizes = [2, 32], strides = [1, 1]} : vector<2x64xf32> to vector<2x32xf32>
    %112 = vector.extract_strided_slice %98 {offsets = [0, 64], sizes = [2, 32], strides = [1, 1]} : vector<2x96xf32> to vector<2x32xf32>
    %113 = vector.extract_strided_slice %101 {offsets = [0, 64], sizes = [2, 32], strides = [1, 1]} : vector<2x96xf32> to vector<2x32xf32>
    %114 = arith.mulf %110, %113 : vector<2x32xf32>
    %115 = arith.addf %112, %114 : vector<2x32xf32>
    %116 = math.tanh %115 : vector<2x32xf32>
    %117 = arith.subf %90, %116 : vector<2x32xf32>
    %118 = arith.mulf %111, %117 : vector<2x32xf32>
    %119 = arith.addf %116, %118 : vector<2x32xf32>
    %120 = arith.index_cast %c3_i32 : i32 to index
    %c0_28 = arith.constant 0 : index
    %c0_29 = arith.constant 0 : index
    %121 = vector.load %arg5[%120, %c0_28, %c0_29] : memref<8x2x32xf32, #tpu.memory_space<vmem>>, vector<1x2x32xf32>
    %122 = vector.shape_cast %121 : vector<1x2x32xf32> to vector<2x32xf32>
    %123 = vector.shape_cast %119 : vector<2x32xf32> to vector<1x2x32xf32>
    tpu.vector_store %arg5[%120, %c0_28, %c0_29], %123 {strides = array<i32>} : memref<8x2x32xf32, #tpu.memory_space<vmem>>, vector<1x2x32xf32>,
    %c4_i32 = arith.constant 4 : i32
    %124 = arith.index_cast %c4_i32 : i32 to index
    %c0_30 = arith.constant 0 : index
    %c0_31 = arith.constant 0 : index
    %125 = vector.load %arg2[%124, %c0_30, %c0_31] : memref<8x2x96xbf16, #tpu.memory_space<vmem>>, vector<1x2x96xbf16>
    %126 = vector.shape_cast %125 : vector<1x2x96xbf16> to vector<2x96xbf16>
    %127 = arith.extf %126 : vector<2x96xbf16> to vector<2x96xf32>
    %128 = arith.truncf %119 : vector<2x32xf32> to vector<2x32xbf16>
    %cst_32 = arith.constant dense<0.000000e+00> : vector<2x96xf32>
    %129 = tpu.matmul %128, %3, %cst_32 {dimension_numbers = #tpu.dot_dimension_numbers<[1], [0], [0], [1], [0, 0, 1, 1], [], []>} : vector<2x32xbf16>, vector<32x96xbf16>, vector<2x96xf32> -> vector<2x96xf32>
    %130 = arith.addf %129, %6 : vector<2x96xf32>
    %131 = vector.extract_strided_slice %127 {offsets = [0, 0], sizes = [2, 64], strides = [1, 1]} : vector<2x96xf32> to vector<2x64xf32>
    %132 = vector.extract_strided_slice %130 {offsets = [0, 0], sizes = [2, 64], strides = [1, 1]} : vector<2x96xf32> to vector<2x64xf32>
    %133 = arith.addf %131, %132 : vector<2x64xf32>
    %134 = arith.negf %133 : vector<2x64xf32>
    %135 = math.exp %134 : vector<2x64xf32>
    %cst_33 = arith.constant 1.000000e+00 : f32
    %136 = vector.broadcast %cst_33 : f32 to vector<2x64xf32>
    %137 = arith.addf %136, %135 : vector<2x64xf32>
    %138 = arith.divf %136, %137 : vector<2x64xf32>
    %139 = vector.extract_strided_slice %138 {offsets = [0, 0], sizes = [2, 32], strides = [1, 1]} : vector<2x64xf32> to vector<2x32xf32>
    %140 = vector.extract_strided_slice %138 {offsets = [0, 32], sizes = [2, 32], strides = [1, 1]} : vector<2x64xf32> to vector<2x32xf32>
    %141 = vector.extract_strided_slice %127 {offsets = [0, 64], sizes = [2, 32], strides = [1, 1]} : vector<2x96xf32> to vector<2x32xf32>
    %142 = vector.extract_strided_slice %130 {offsets = [0, 64], sizes = [2, 32], strides = [1, 1]} : vector<2x96xf32> to vector<2x32xf32>
    %143 = arith.mulf %139, %142 : vector<2x32xf32>
    %144 = arith.addf %141, %143 : vector<2x32xf32>
    %145 = math.tanh %144 : vector<2x32xf32>
    %146 = arith.subf %119, %145 : vector<2x32xf32>
    %147 = arith.mulf %140, %146 : vector<2x32xf32>
    %148 = arith.addf %145, %147 : vector<2x32xf32>
    %149 = arith.index_cast %c4_i32 : i32 to index
    %c0_34 = arith.constant 0 : index
    %c0_35 = arith.constant 0 : index
    %150 = vector.load %arg5[%149, %c0_34, %c0_35] : memref<8x2x32xf32, #tpu.memory_space<vmem>>, vector<1x2x32xf32>
    %151 = vector.shape_cast %150 : vector<1x2x32xf32> to vector<2x32xf32>
    %152 = vector.shape_cast %148 : vector<2x32xf32> to vector<1x2x32xf32>
    tpu.vector_store %arg5[%149, %c0_34, %c0_35], %152 {strides = array<i32>} : memref<8x2x32xf32, #tpu.memory_space<vmem>>, vector<1x2x32xf32>,
    %c5_i32 = arith.constant 5 : i32
    %153 = arith.index_cast %c5_i32 : i32 to index
    %c0_36 = arith.constant 0 : index
    %c0_37 = arith.constant 0 : index
    %154 = vector.load %arg2[%153, %c0_36, %c0_37] : memref<8x2x96xbf16, #tpu.memory_space<vmem>>, vector<1x2x96xbf16>
    %155 = vector.shape_cast %154 : vector<1x2x96xbf16> to vector<2x96xbf16>
    %156 = arith.extf %155 : vector<2x96xbf16> to vector<2x96xf32>
    %157 = arith.truncf %148 : vector<2x32xf32> to vector<2x32xbf16>
    %cst_38 = arith.constant dense<0.000000e+00> : vector<2x96xf32>
    %158 = tpu.matmul %157, %3, %cst_38 {dimension_numbers = #tpu.dot_dimension_numbers<[1], [0], [0], [1], [0, 0, 1, 1], [], []>} : vector<2x32xbf16>, vector<32x96xbf16>, vector<2x96xf32> -> vector<2x96xf32>
    %159 = arith.addf %158, %6 : vector<2x96xf32>
    %160 = vector.extract_strided_slice %156 {offsets = [0, 0], sizes = [2, 64], strides = [1, 1]} : vector<2x96xf32> to vector<2x64xf32>
    %161 = vector.extract_strided_slice %159 {offsets = [0, 0], sizes = [2, 64], strides = [1, 1]} : vector<2x96xf32> to vector<2x64xf32>
    %162 = arith.addf %160, %161 : vector<2x64xf32>
    %163 = arith.negf %162 : vector<2x64xf32>
    %164 = math.exp %163 : vector<2x64xf32>
    %cst_39 = arith.constant 1.000000e+00 : f32
    %165 = vector.broadcast %cst_39 : f32 to vector<2x64xf32>
    %166 = arith.addf %165, %164 : vector<2x64xf32>
    %167 = arith.divf %165, %166 : vector<2x64xf32>
    %168 = vector.extract_strided_slice %167 {offsets = [0, 0], sizes = [2, 32], strides = [1, 1]} : vector<2x64xf32> to vector<2x32xf32>
    %169 = vector.extract_strided_slice %167 {offsets = [0, 32], sizes = [2, 32], strides = [1, 1]} : vector<2x64xf32> to vector<2x32xf32>
    %170 = vector.extract_strided_slice %156 {offsets = [0, 64], sizes = [2, 32], strides = [1, 1]} : vector<2x96xf32> to vector<2x32xf32>
    %171 = vector.extract_strided_slice %159 {offsets = [0, 64], sizes = [2, 32], strides = [1, 1]} : vector<2x96xf32> to vector<2x32xf32>
    %172 = arith.mulf %168, %171 : vector<2x32xf32>
    %173 = arith.addf %170, %172 : vector<2x32xf32>
    %174 = math.tanh %173 : vector<2x32xf32>
    %175 = arith.subf %148, %174 : vector<2x32xf32>
    %176 = arith.mulf %169, %175 : vector<2x32xf32>
    %177 = arith.addf %174, %176 : vector<2x32xf32>
    %178 = arith.index_cast %c5_i32 : i32 to index
    %c0_40 = arith.constant 0 : index
    %c0_41 = arith.constant 0 : index
    %179 = vector.load %arg5[%178, %c0_40, %c0_41] : memref<8x2x32xf32, #tpu.memory_space<vmem>>, vector<1x2x32xf32>
    %180 = vector.shape_cast %179 : vector<1x2x32xf32> to vector<2x32xf32>
    %181 = vector.shape_cast %177 : vector<2x32xf32> to vector<1x2x32xf32>
    tpu.vector_store %arg5[%178, %c0_40, %c0_41], %181 {strides = array<i32>} : memref<8x2x32xf32, #tpu.memory_space<vmem>>, vector<1x2x32xf32>,
    %c6_i32 = arith.constant 6 : i32
    %182 = arith.index_cast %c6_i32 : i32 to index
    %c0_42 = arith.constant 0 : index
    %c0_43 = arith.constant 0 : index
    %183 = vector.load %arg2[%182, %c0_42, %c0_43] : memref<8x2x96xbf16, #tpu.memory_space<vmem>>, vector<1x2x96xbf16>
    %184 = vector.shape_cast %183 : vector<1x2x96xbf16> to vector<2x96xbf16>
    %185 = arith.extf %184 : vector<2x96xbf16> to vector<2x96xf32>
    %186 = arith.truncf %177 : vector<2x32xf32> to vector<2x32xbf16>
    %cst_44 = arith.constant dense<0.000000e+00> : vector<2x96xf32>
    %187 = tpu.matmul %186, %3, %cst_44 {dimension_numbers = #tpu.dot_dimension_numbers<[1], [0], [0], [1], [0, 0, 1, 1], [], []>} : vector<2x32xbf16>, vector<32x96xbf16>, vector<2x96xf32> -> vector<2x96xf32>
    %188 = arith.addf %187, %6 : vector<2x96xf32>
    %189 = vector.extract_strided_slice %185 {offsets = [0, 0], sizes = [2, 64], strides = [1, 1]} : vector<2x96xf32> to vector<2x64xf32>
    %190 = vector.extract_strided_slice %188 {offsets = [0, 0], sizes = [2, 64], strides = [1, 1]} : vector<2x96xf32> to vector<2x64xf32>
    %191 = arith.addf %189, %190 : vector<2x64xf32>
    %192 = arith.negf %191 : vector<2x64xf32>
    %193 = math.exp %192 : vector<2x64xf32>
    %cst_45 = arith.constant 1.000000e+00 : f32
    %194 = vector.broadcast %cst_45 : f32 to vector<2x64xf32>
    %195 = arith.addf %194, %193 : vector<2x64xf32>
    %196 = arith.divf %194, %195 : vector<2x64xf32>
    %197 = vector.extract_strided_slice %196 {offsets = [0, 0], sizes = [2, 32], strides = [1, 1]} : vector<2x64xf32> to vector<2x32xf32>
    %198 = vector.extract_strided_slice %196 {offsets = [0, 32], sizes = [2, 32], strides = [1, 1]} : vector<2x64xf32> to vector<2x32xf32>
    %199 = vector.extract_strided_slice %185 {offsets = [0, 64], sizes = [2, 32], strides = [1, 1]} : vector<2x96xf32> to vector<2x32xf32>
    %200 = vector.extract_strided_slice %188 {offsets = [0, 64], sizes = [2, 32], strides = [1, 1]} : vector<2x96xf32> to vector<2x32xf32>
    %201 = arith.mulf %197, %200 : vector<2x32xf32>
    %202 = arith.addf %199, %201 : vector<2x32xf32>
    %203 = math.tanh %202 : vector<2x32xf32>
    %204 = arith.subf %177, %203 : vector<2x32xf32>
    %205 = arith.mulf %198, %204 : vector<2x32xf32>
    %206 = arith.addf %203, %205 : vector<2x32xf32>
    %207 = arith.index_cast %c6_i32 : i32 to index
    %c0_46 = arith.constant 0 : index
    %c0_47 = arith.constant 0 : index
    %208 = vector.load %arg5[%207, %c0_46, %c0_47] : memref<8x2x32xf32, #tpu.memory_space<vmem>>, vector<1x2x32xf32>
    %209 = vector.shape_cast %208 : vector<1x2x32xf32> to vector<2x32xf32>
    %210 = vector.shape_cast %206 : vector<2x32xf32> to vector<1x2x32xf32>
    tpu.vector_store %arg5[%207, %c0_46, %c0_47], %210 {strides = array<i32>} : memref<8x2x32xf32, #tpu.memory_space<vmem>>, vector<1x2x32xf32>,
    %c7_i32 = arith.constant 7 : i32
    %211 = arith.index_cast %c7_i32 : i32 to index
    %c0_48 = arith.constant 0 : index
    %c0_49 = arith.constant 0 : index
    %212 = vector.load %arg2[%211, %c0_48, %c0_49] : memref<8x2x96xbf16, #tpu.memory_space<vmem>>, vector<1x2x96xbf16>
    %213 = vector.shape_cast %212 : vector<1x2x96xbf16> to vector<2x96xbf16>
    %214 = arith.extf %213 : vector<2x96xbf16> to vector<2x96xf32>
    %215 = arith.truncf %206 : vector<2x32xf32> to vector<2x32xbf16>
    %cst_50 = arith.constant dense<0.000000e+00> : vector<2x96xf32>
    %216 = tpu.matmul %215, %3, %cst_50 {dimension_numbers = #tpu.dot_dimension_numbers<[1], [0], [0], [1], [0, 0, 1, 1], [], []>} : vector<2x32xbf16>, vector<32x96xbf16>, vector<2x96xf32> -> vector<2x96xf32>
    %217 = arith.addf %216, %6 : vector<2x96xf32>
    %218 = vector.extract_strided_slice %214 {offsets = [0, 0], sizes = [2, 64], strides = [1, 1]} : vector<2x96xf32> to vector<2x64xf32>
    %219 = vector.extract_strided_slice %217 {offsets = [0, 0], sizes = [2, 64], strides = [1, 1]} : vector<2x96xf32> to vector<2x64xf32>
    %220 = arith.addf %218, %219 : vector<2x64xf32>
    %221 = arith.negf %220 : vector<2x64xf32>
    %222 = math.exp %221 : vector<2x64xf32>
    %cst_51 = arith.constant 1.000000e+00 : f32
    %223 = vector.broadcast %cst_51 : f32 to vector<2x64xf32>
    %224 = arith.addf %223, %222 : vector<2x64xf32>
    %225 = arith.divf %223, %224 : vector<2x64xf32>
    %226 = vector.extract_strided_slice %225 {offsets = [0, 0], sizes = [2, 32], strides = [1, 1]} : vector<2x64xf32> to vector<2x32xf32>
    %227 = vector.extract_strided_slice %225 {offsets = [0, 32], sizes = [2, 32], strides = [1, 1]} : vector<2x64xf32> to vector<2x32xf32>
    %228 = vector.extract_strided_slice %214 {offsets = [0, 64], sizes = [2, 32], strides = [1, 1]} : vector<2x96xf32> to vector<2x32xf32>
    %229 = vector.extract_strided_slice %217 {offsets = [0, 64], sizes = [2, 32], strides = [1, 1]} : vector<2x96xf32> to vector<2x32xf32>
    %230 = arith.mulf %226, %229 : vector<2x32xf32>
    %231 = arith.addf %228, %230 : vector<2x32xf32>
    %232 = math.tanh %231 : vector<2x32xf32>
    %233 = arith.subf %206, %232 : vector<2x32xf32>
    %234 = arith.mulf %227, %233 : vector<2x32xf32>
    %235 = arith.addf %232, %234 : vector<2x32xf32>
    %236 = arith.index_cast %c7_i32 : i32 to index
    %c0_52 = arith.constant 0 : index
    %c0_53 = arith.constant 0 : index
    %237 = vector.load %arg5[%236, %c0_52, %c0_53] : memref<8x2x32xf32, #tpu.memory_space<vmem>>, vector<1x2x32xf32>
    %238 = vector.shape_cast %237 : vector<1x2x32xf32> to vector<2x32xf32>
    %239 = vector.shape_cast %235 : vector<2x32xf32> to vector<1x2x32xf32>
    tpu.vector_store %arg5[%236, %c0_52, %c0_53], %239 {strides = array<i32>} : memref<8x2x32xf32, #tpu.memory_space<vmem>>, vector<1x2x32xf32>,
    %c8_i32 = arith.constant 8 : i32
    %c0_54 = arith.constant 0 : index
    %c0_55 = arith.constant 0 : index
    %240 = vector.load %arg6[%c0_54, %c0_55] : memref<2x32xf32, #tpu.memory_space<vmem>>, vector<2x32xf32>
    tpu.vector_store %arg6[%c0_54, %c0_55], %235 {strides = array<i32>} : memref<2x32xf32, #tpu.memory_space<vmem>>, vector<2x32xf32>,
    return
  }
  func.func @transform_0(%arg0: i32, %arg1: i32) -> (i32, i32, i32) {
    %c0_i32 = arith.constant 0 : i32
    %c0_i32_0 = arith.constant 0 : i32
    return %arg1, %arg0, %c0_i32 : i32, i32, i32
  }
  func.func @transform_1(%arg0: i32, %arg1: i32) -> (i32, i32) {
    %c0_i32 = arith.constant 0 : i32
    %c0_i32_0 = arith.constant 0 : i32
    %c0_i32_1 = arith.constant 0 : i32
    return %c0_i32, %c0_i32_0 : i32, i32
  }
  func.func @transform_2(%arg0: i32, %arg1: i32) -> (i32, i32) {
    %c0_i32 = arith.constant 0 : i32
    %c0_i32_0 = arith.constant 0 : i32
    %c0_i32_1 = arith.constant 0 : i32
    return %c0_i32, %c0_i32_0 : i32, i32
  }
  func.func @transform_3(%arg0: i32, %arg1: i32) -> (i32, i32, i32) {
    %c0_i32 = arith.constant 0 : i32
    %c0_i32_0 = arith.constant 0 : i32
    return %arg1, %arg0, %c0_i32 : i32, i32, i32
  }
}

module attributes {stable_mosaic.version = 11 : i64} {
  func.func @matmul_bias_kernel(%arg0: i32, %arg1: i32, %arg2: memref<16x32xf32, #tpu.memory_space<vmem>>, %arg3: memref<32x16xbf16, #tpu.memory_space<vmem>>, %arg4: memref<1x16xf32, #tpu.memory_space<vmem>>, %arg5: memref<16x16xf32, #tpu.memory_space<vmem>>) attributes {dimension_semantics = [#tpu.dimension_semantics<parallel>, #tpu.dimension_semantics<parallel>], iteration_bounds = array<i64: 1, 1>, scalar_prefetch = 0 : i64, scratch_operands = 0 : i64, tpu.core_type = #tpu.core_type<tc>, window_params = [{transform_indices = @transform_0, window_bounds = array<i64: 16, 32>}, {transform_indices = @transform_1, window_bounds = array<i64: 32, 16>}, {transform_indices = @transform_2, window_bounds = array<i64: 1, 16>}, {transform_indices = @transform_3, window_bounds = array<i64: 16, 16>}]} {
    %c0 = arith.constant 0 : index
    %c0_0 = arith.constant 0 : index
    %0 = vector.load %arg2[%c0, %c0_0] : memref<16x32xf32, #tpu.memory_space<vmem>>, vector<16x32xf32>
    %1 = arith.truncf %0 : vector<16x32xf32> to vector<16x32xbf16>
    %c0_1 = arith.constant 0 : index
    %c0_2 = arith.constant 0 : index
    %2 = vector.load %arg3[%c0_1, %c0_2] : memref<32x16xbf16, #tpu.memory_space<vmem>>, vector<32x16xbf16>
    %cst = arith.constant dense<0.000000e+00> : vector<16x16xf32>
    %3 = tpu.matmul %1, %2, %cst {dimension_numbers = #tpu.dot_dimension_numbers<[1], [0], [0], [1], [0, 0, 1, 1], [], []>} : vector<16x32xbf16>, vector<32x16xbf16>, vector<16x16xf32> -> vector<16x16xf32>
    %c0_3 = arith.constant 0 : index
    %c0_4 = arith.constant 0 : index
    %4 = vector.load %arg4[%c0_3, %c0_4] : memref<1x16xf32, #tpu.memory_space<vmem>>, vector<1x16xf32>
    %5 = vector.broadcast %4 : vector<1x16xf32> to vector<16x16xf32>
    %6 = arith.addf %3, %5 : vector<16x16xf32>
    %c0_5 = arith.constant 0 : index
    %c0_6 = arith.constant 0 : index
    %7 = vector.load %arg5[%c0_5, %c0_6] : memref<16x16xf32, #tpu.memory_space<vmem>>, vector<16x16xf32>
    tpu.vector_store %arg5[%c0_5, %c0_6], %6 {strides = array<i32>} : memref<16x16xf32, #tpu.memory_space<vmem>>, vector<16x16xf32>,
    return
  }
  func.func @transform_0(%arg0: i32, %arg1: i32) -> (i32, i32) {
    %c0_i32 = arith.constant 0 : i32
    %c0_i32_0 = arith.constant 0 : i32
    return %arg1, %c0_i32 : i32, i32
  }
  func.func @transform_1(%arg0: i32, %arg1: i32) -> (i32, i32) {
    %c0_i32 = arith.constant 0 : i32
    %c0_i32_0 = arith.constant 0 : i32
    return %c0_i32, %arg0 : i32, i32
  }
  func.func @transform_2(%arg0: i32, %arg1: i32) -> (i32, i32) {
    %c0_i32 = arith.constant 0 : i32
    %c0_i32_0 = arith.constant 0 : i32
    return %c0_i32, %arg0 : i32, i32
  }
  func.func @transform_3(%arg0: i32, %arg1: i32) -> (i32, i32) {
    %c0_i32 = arith.constant 0 : i32
    return %arg1, %arg0 : i32, i32
  }
}

</mosaic_0001>

<llo_original>
// kernel: gru_model_forward.5
$region0: #{gru_model_forward.5}
  #allocation0 [shape = 'u32[]', space=smem, size = 0x4, offset = 0x4, fixed_abs, tag = 'smem constant byte address 0x4 - core index']
  #allocation1 [shape = 'u32[144,128]{1,0:T(1,128)}', space=vmem, size = 0x12000, scoped, tag = 'internal scratch']
  %s0 = inlined_call_operand.vmem [shape: f32[16,16], index: 0, kind: input, shape index: {}]
  %s1 = inlined_call_operand.vmem [shape: bf16[16,96], index: 1, kind: input, shape index: {}]
  %s2 = inlined_call_operand.vmem [shape: f32[1,96], index: 2, kind: input, shape index: {}]
  %s3 = inlined_call_operand.vmem [shape: bf16[16,96], index: 3, kind: output, shape index: {}]
  %s4 = sld [smem:[#allocation0]]
  $region22: #{gru_model_forward.5} parent=0
    _
  %s6 = ssub.s32 1, %s4
  %s7 = scalar_select 0, %s6, %s4
  // Predicated region
  $region2: #{gru_model_forward.5} parent=0 // pred_check
    _
  $region3: #{gru_model_forward.5} parent=0 // pred_check_branch
    %9 = sbr.rel (0) target = $region5
  $region4: #{gru_model_forward.5} parent=0 // pred_region
    _
  $region5: #{gru_model_forward.5} parent=0 // pred_fallthru
    _
  // Predicated region
  $region6: #{gru_model_forward.5} parent=0 // pred_check
    _
  $region7: #{gru_model_forward.5} parent=0 // pred_check_branch
    %11 = sbr.rel (0) target = $region9
  $region8: #{gru_model_forward.5} parent=0 // pred_region
    _
  $region9: #{gru_model_forward.5} parent=0 // pred_fallthru
    _
  // Predicated region
  $region10: #{gru_model_forward.5} parent=0 // pred_check
    _
  $region11: #{gru_model_forward.5} parent=0 // pred_check_branch
    %13 = sbr.rel (0) target = $region13
  $region12: #{gru_model_forward.5} parent=0 // pred_region
    _
  $region13: #{gru_model_forward.5} parent=0 // pred_fallthru
    _
  %v15 = vld [vmem:[%s0] sm:$0xff]
  %v16 = vld [vmem:[%s0 + $0x8] sm:$0xff]
  %v17 = vpack.c.bf16 %v16, %v15
  %v18 = vld [vmem:[%s1] sm:$0xf]
  %v19 = vld [vmem:[%s1 + $0x4] sm:$0xf]
  %v20 = vld [vmem:[%s2] sm:$0x1]
  %v22 = vlaneseq
  %v23 = vshrl.u32 %v22, 7
  %v24 = vsub.s32 0, %v23
  %v25 = vrot.slane %v20, %v24
  %v29 = vunpack.c.l.b16 %v18
  %v30 = vunpack.c.l.b16 %v19
  %v31 = vpack.c.b16 %v30, %v29
  %vm33 = vcmask 130048
  %v35 = vsel %vm33, %v17, 0
  %37 = vmatprep.subr.bf16.mxu0 0
  %38 = vmatpush1.bf16.msra.mxu0 %v31
  %39 = vmatprep.subr.bf16.mxu0 0
  %40 = vmatpush1.bf16.msra.mxu0 0
  %41 = vmatprep.subr.bf16.mxu0 0
  %42 = vmatpush1.bf16.msra.mxu0 0
  %43 = vmatprep.subr.bf16.mxu0 0
  %44 = vmatpush1.bf16.msra.mxu0 0
  %45 = vmatprep.subr.bf16.mxu0 0
  %46 = vmatpush1.bf16.msra.mxu0 0
  %47 = vmatprep.subr.bf16.mxu0 0
  %48 = vmatpush1.bf16.msra.mxu0 0
  %49 = vmatprep.subr.bf16.mxu0 0
  %50 = vmatpush1.bf16.msra.mxu0 0
  %51 = vmatprep.subr.bf16.mxu0 0
  %52 = vmatpush1.bf16.msra.mxu0 0
  %53 = vmatprep.subr.bf16.mxu0 0
  %54 = vmatpush1.bf16.msra.mxu0 0
  %55 = vmatprep.subr.bf16.mxu0 0
  %56 = vmatpush1.bf16.msra.mxu0 0
  %57 = vmatprep.subr.bf16.mxu0 0
  %58 = vmatpush1.bf16.msra.mxu0 0
  %59 = vmatprep.subr.bf16.mxu0 0
  %60 = vmatpush1.bf16.msra.mxu0 0
  %61 = vmatprep.subr.bf16.mxu0 0
  %62 = vmatpush1.bf16.msra.mxu0 0
  %63 = vmatprep.subr.bf16.mxu0 0
  %64 = vmatpush1.bf16.msra.mxu0 0
  %65 = vmatprep.subr.bf16.mxu0 0
  %66 = vmatpush1.bf16.msra.mxu0 0
  %67 = vmatprep.subr.bf16.mxu0 0
  %68 = vmatpush1.bf16.msra.mxu0 0
  %69 = vmatprep.mubr.bf16.mxu0 0
  %70 = vmatmul.mubr.bf16.gmra.mrb[0].mxu0 %v35
  %v71 = vpop.f32.mrb[0].mxu0
  %v72 = vadd.f32 %v25, %v71
  %v73 = vpop.f32.mrb[0].mxu0
  %v74 = vpop.f32.mrb[0].mxu0
  %v75 = vadd.f32 %v25, %v74
  %v76 = vpop.f32.mrb[0].mxu0
  %77 = vdwg.mxu0
  %v78 = vpack.c.bf16 %v75, %v72
  %v80 = vunpack.c.l.b16 %v78
  %v81 = vunpack.c.h.b16 %v78
  %v82 = vpack.c.b16 %v80, %v80
  %v83 = vpack.c.b16 %v81, %v81
  %vm86 = vcmask 781312
  %87 = vst.msk [vmem:[%s3] sm:$0xf] %vm86, %v82
  %88 = vst.msk [vmem:[%s3 + $0x4] sm:$0xf] %vm86, %v83
  // Predicated region
  $region14: #{gru_model_forward.5} parent=0 // pred_check
    _
  $region15: #{gru_model_forward.5} parent=0 // pred_check_branch
    %90 = sbr.rel (0) target = $region17
  $region16: #{gru_model_forward.5} parent=0 // pred_region
    _
  $region17: #{gru_model_forward.5} parent=0 // pred_fallthru
    _
  // Predicated region
  $region18: #{gru_model_forward.5} parent=0 // pred_check
    _
  $region19: #{gru_model_forward.5} parent=0 // pred_check_branch
    %92 = sbr.rel (0) target = $region21
  $region20: #{gru_model_forward.5} parent=0 // pred_region
    _
  $region21: #{gru_model_forward.5} parent=0 // pred_fallthru
    _

// kernel: gru_model_forward.7
$region0: #{gru_model_forward.7}
  #allocation0 [shape = 'u32[]', space=smem, size = 0x4, offset = 0x4, fixed_abs, tag = 'smem constant byte address 0x4 - core index']
  #allocation1 [shape = 'u32[144,128]{1,0:T(1,128)}', space=vmem, size = 0x12000, scoped, tag = 'internal scratch']
  %s0 = inlined_call_operand.vmem [shape: f32[16,32], index: 0, kind: input, shape index: {}]
  %s1 = inlined_call_operand.vmem [shape: bf16[32,96], index: 1, kind: input, shape index: {}]
  %s2 = inlined_call_operand.vmem [shape: f32[1,96], index: 2, kind: input, shape index: {}]
  %s3 = inlined_call_operand.vmem [shape: bf16[16,96], index: 3, kind: output, shape index: {}]
  %s4 = sld [smem:[#allocation0]]
  $region22: #{gru_model_forward.7} parent=0
    _
  %s6 = ssub.s32 1, %s4
  %s7 = scalar_select 0, %s6, %s4
  // Predicated region
  $region2: #{gru_model_forward.7} parent=0 // pred_check
    _
  $region3: #{gru_model_forward.7} parent=0 // pred_check_branch
    %9 = sbr.rel (0) target = $region5
  $region4: #{gru_model_forward.7} parent=0 // pred_region
    _
  $region5: #{gru_model_forward.7} parent=0 // pred_fallthru
    _
  // Predicated region
  $region6: #{gru_model_forward.7} parent=0 // pred_check
    _
  $region7: #{gru_model_forward.7} parent=0 // pred_check_branch
    %11 = sbr.rel (0) target = $region9
  $region8: #{gru_model_forward.7} parent=0 // pred_region
    _
  $region9: #{gru_model_forward.7} parent=0 // pred_fallthru
    _
  // Predicated region
  $region10: #{gru_model_forward.7} parent=0 // pred_check
    _
  $region11: #{gru_model_forward.7} parent=0 // pred_check_branch
    %13 = sbr.rel (0) target = $region13
  $region12: #{gru_model_forward.7} parent=0 // pred_region
    _
  $region13: #{gru_model_forward.7} parent=0 // pred_fallthru
    _
  %v15 = vld [vmem:[%s0] sm:$0xff]
  %v16 = vld [vmem:[%s0 + $0x8] sm:$0xff]
  %v17 = vpack.c.bf16 %v16, %v15
  %v18 = vld [vmem:[%s1] sm:$0xf]
  %v19 = vld [vmem:[%s1 + $0x4] sm:$0xf]
  %v20 = vld [vmem:[%s1 + $0x8] sm:$0xf]
  %v21 = vld [vmem:[%s1 + $0xc] sm:$0xf]
  %v22 = vld [vmem:[%s2] sm:$0x1]
  %v24 = vlaneseq
  %v25 = vshrl.u32 %v24, 7
  %v26 = vsub.s32 0, %v25
  %v27 = vrot.slane %v22, %v26
  %v33 = vunpack.c.l.b16 %v18
  %v34 = vunpack.c.l.b16 %v19
  %v35 = vunpack.c.l.b16 %v20
  %v36 = vunpack.c.l.b16 %v21
  %v37 = vpack.c.b16 %v34, %v33
  %v38 = vpack.c.b16 %v36, %v35
  %vm41 = vcmask 261120
  %v43 = vsel %vm41, %v17, 0
  %45 = vmatprep.subr.bf16.mxu0 0
  %46 = vmatpush1.bf16.msra.mxu0 %v37
  %47 = vmatprep.subr.bf16.mxu0 0
  %48 = vmatpush1.bf16.msra.mxu0 %v38
  %49 = vmatprep.subr.bf16.mxu0 0
  %50 = vmatpush1.bf16.msra.mxu0 0
  %51 = vmatprep.subr.bf16.mxu0 0
  %52 = vmatpush1.bf16.msra.mxu0 0
  %53 = vmatprep.subr.bf16.mxu0 0
  %54 = vmatpush1.bf16.msra.mxu0 0
  %55 = vmatprep.subr.bf16.mxu0 0
  %56 = vmatpush1.bf16.msra.mxu0 0
  %57 = vmatprep.subr.bf16.mxu0 0
  %58 = vmatpush1.bf16.msra.mxu0 0
  %59 = vmatprep.subr.bf16.mxu0 0
  %60 = vmatpush1.bf16.msra.mxu0 0
  %61 = vmatprep.subr.bf16.mxu0 0
  %62 = vmatpush1.bf16.msra.mxu0 0
  %63 = vmatprep.subr.bf16.mxu0 0
  %64 = vmatpush1.bf16.msra.mxu0 0
  %65 = vmatprep.subr.bf16.mxu0 0
  %66 = vmatpush1.bf16.msra.mxu0 0
  %67 = vmatprep.subr.bf16.mxu0 0
  %68 = vmatpush1.bf16.msra.mxu0 0
  %69 = vmatprep.subr.bf16.mxu0 0
  %70 = vmatpush1.bf16.msra.mxu0 0
  %71 = vmatprep.subr.bf16.mxu0 0
  %72 = vmatpush1.bf16.msra.mxu0 0
  %73 = vmatprep.subr.bf16.mxu0 0
  %74 = vmatpush1.bf16.msra.mxu0 0
  %75 = vmatprep.subr.bf16.mxu0 0
  %76 = vmatpush1.bf16.msra.mxu0 0
  %77 = vmatprep.mubr.bf16.mxu0 0
  %78 = vmatmul.mubr.bf16.gmra.mrb[0].mxu0 %v43
  %v79 = vpop.f32.mrb[0].mxu0
  %v80 = vadd.f32 %v27, %v79
  %v81 = vpop.f32.mrb[0].mxu0
  %v82 = vpop.f32.mrb[0].mxu0
  %v83 = vadd.f32 %v27, %v82
  %v84 = vpop.f32.mrb[0].mxu0
  %85 = vdwg.mxu0
  %v86 = vpack.c.bf16 %v83, %v80
  %v88 = vunpack.c.l.b16 %v86
  %v89 = vunpack.c.h.b16 %v86
  %v90 = vpack.c.b16 %v88, %v88
  %v91 = vpack.c.b16 %v89, %v89
  %vm94 = vcmask 781312
  %95 = vst.msk [vmem:[%s3] sm:$0xf] %vm94, %v90
  %96 = vst.msk [vmem:[%s3 + $0x4] sm:$0xf] %vm94, %v91
  // Predicated region
  $region14: #{gru_model_forward.7} parent=0 // pred_check
    _
  $region15: #{gru_model_forward.7} parent=0 // pred_check_branch
    %98 = sbr.rel (0) target = $region17
  $region16: #{gru_model_forward.7} parent=0 // pred_region
    _
  $region17: #{gru_model_forward.7} parent=0 // pred_fallthru
    _
  // Predicated region
  $region18: #{gru_model_forward.7} parent=0 // pred_check
    _
  $region19: #{gru_model_forward.7} parent=0 // pred_check_branch
    %100 = sbr.rel (0) target = $region21
  $region20: #{gru_model_forward.7} parent=0 // pred_region
    _
  $region21: #{gru_model_forward.7} parent=0 // pred_fallthru
    _

// kernel: gru_model_forward.9
$region0: #{gru_model_forward.9}
  #allocation0 [shape = 'u32[]', space=smem, size = 0x4, offset = 0x4, fixed_abs, tag = 'smem constant byte address 0x4 - core index']
  #allocation1 [shape = 'u32[144,128]{1,0:T(1,128)}', space=vmem, size = 0x12000, scoped, tag = 'internal scratch']
  %s0 = inlined_call_operand.vmem [shape: f32[16,32], index: 0, kind: input, shape index: {}]
  %s1 = inlined_call_operand.vmem [shape: bf16[32,16], index: 1, kind: input, shape index: {}]
  %s2 = inlined_call_operand.vmem [shape: f32[1,16], index: 2, kind: input, shape index: {}]
  %s3 = inlined_call_operand.vmem [shape: f32[16,16], index: 3, kind: output, shape index: {}]
  %s4 = sld [smem:[#allocation0]]
  $region22: #{gru_model_forward.9} parent=0
    _
  %s6 = ssub.s32 1, %s4
  %s7 = scalar_select 0, %s6, %s4
  // Predicated region
  $region2: #{gru_model_forward.9} parent=0 // pred_check
    _
  $region3: #{gru_model_forward.9} parent=0 // pred_check_branch
    %9 = sbr.rel (0) target = $region5
  $region4: #{gru_model_forward.9} parent=0 // pred_region
    _
  $region5: #{gru_model_forward.9} parent=0 // pred_fallthru
    _
  // Predicated region
  $region6: #{gru_model_forward.9} parent=0 // pred_check
    _
  $region7: #{gru_model_forward.9} parent=0 // pred_check_branch
    %11 = sbr.rel (0) target = $region9
  $region8: #{gru_model_forward.9} parent=0 // pred_region
    _
  $region9: #{gru_model_forward.9} parent=0 // pred_fallthru
    _
  // Predicated region
  $region10: #{gru_model_forward.9} parent=0 // pred_check
    _
  $region11: #{gru_model_forward.9} parent=0 // pred_check_branch
    %13 = sbr.rel (0) target = $region13
  $region12: #{gru_model_forward.9} parent=0 // pred_region
    _
  $region13: #{gru_model_forward.9} parent=0 // pred_fallthru
    _
  %v15 = vld [vmem:[%s0] sm:$0xff]
  %v16 = vld [vmem:[%s0 + $0x8] sm:$0xff]
  %v17 = vpack.c.bf16 %v16, %v15
  %v18 = vld [vmem:[%s1] sm:$0xf]
  %v19 = vld [vmem:[%s1 + $0x4] sm:$0xf]
  %v20 = vld [vmem:[%s1 + $0x8] sm:$0xf]
  %v21 = vld [vmem:[%s1 + $0xc] sm:$0xf]
  %v22 = vld [vmem:[%s2] sm:$0x1]
  %v24 = vlaneseq
  %v25 = vshrl.u32 %v24, 7
  %v26 = vsub.s32 0, %v25
  %v27 = vrot.slane %v22, %v26
  %v33 = vunpack.c.l.b16 %v18
  %v34 = vunpack.c.l.b16 %v19
  %v35 = vunpack.c.l.b16 %v20
  %v36 = vunpack.c.l.b16 %v21
  %v37 = vpack.c.b16 %v34, %v33
  %v38 = vpack.c.b16 %v36, %v35
  %vm41 = vcmask 261120
  %v43 = vsel %vm41, %v17, 0
  %45 = vmatprep.subr.bf16.mxu0 0
  %46 = vmatpush1.bf16.msra.mxu0 %v37
  %47 = vmatprep.subr.bf16.mxu0 0
  %48 = vmatpush1.bf16.msra.mxu0 %v38
  %49 = vmatprep.subr.bf16.mxu0 0
  %50 = vmatpush1.bf16.msra.mxu0 0
  %51 = vmatprep.subr.bf16.mxu0 0
  %52 = vmatpush1.bf16.msra.mxu0 0
  %53 = vmatprep.subr.bf16.mxu0 0
  %54 = vmatpush1.bf16.msra.mxu0 0
  %55 = vmatprep.subr.bf16.mxu0 0
  %56 = vmatpush1.bf16.msra.mxu0 0
  %57 = vmatprep.subr.bf16.mxu0 0
  %58 = vmatpush1.bf16.msra.mxu0 0
  %59 = vmatprep.subr.bf16.mxu0 0
  %60 = vmatpush1.bf16.msra.mxu0 0
  %61 = vmatprep.subr.bf16.mxu0 0
  %62 = vmatpush1.bf16.msra.mxu0 0
  %63 = vmatprep.subr.bf16.mxu0 0
  %64 = vmatpush1.bf16.msra.mxu0 0
  %65 = vmatprep.subr.bf16.mxu0 0
  %66 = vmatpush1.bf16.msra.mxu0 0
  %67 = vmatprep.subr.bf16.mxu0 0
  %68 = vmatpush1.bf16.msra.mxu0 0
  %69 = vmatprep.subr.bf16.mxu0 0
  %70 = vmatpush1.bf16.msra.mxu0 0
  %71 = vmatprep.subr.bf16.mxu0 0
  %72 = vmatpush1.bf16.msra.mxu0 0
  %73 = vmatprep.subr.bf16.mxu0 0
  %74 = vmatpush1.bf16.msra.mxu0 0
  %75 = vmatprep.subr.bf16.mxu0 0
  %76 = vmatpush1.bf16.msra.mxu0 0
  %77 = vmatprep.mubr.bf16.mxu0 0
  %78 = vmatmul.mubr.bf16.gmra.mrb[0].mxu0 %v43
  %v79 = vpop.f32.mrb[0].mxu0
  %v80 = vadd.f32 %v27, %v79
  %v81 = vpop.f32.mrb[0].mxu0
  %v82 = vpop.f32.mrb[0].mxu0
  %v83 = vadd.f32 %v27, %v82
  %v84 = vpop.f32.mrb[0].mxu0
  %85 = vdwg.mxu0
  %vm86 = vcmask 130048
  %87 = vst.msk [vmem:[%s3] sm:$0xff] %vm86, %v80
  %88 = vst.msk [vmem:[%s3 + $0x8] sm:$0xff] %vm86, %v83
  // Predicated region
  $region14: #{gru_model_forward.9} parent=0 // pred_check
    _
  $region15: #{gru_model_forward.9} parent=0 // pred_check_branch
    %90 = sbr.rel (0) target = $region17
  $region16: #{gru_model_forward.9} parent=0 // pred_region
    _
  $region17: #{gru_model_forward.9} parent=0 // pred_fallthru
    _
  // Predicated region
  $region18: #{gru_model_forward.9} parent=0 // pred_check
    _
  $region19: #{gru_model_forward.9} parent=0 // pred_check_branch
    %92 = sbr.rel (0) target = $region21
  $region20: #{gru_model_forward.9} parent=0 // pred_region
    _
  $region21: #{gru_model_forward.9} parent=0 // pred_fallthru
    _

// kernel: gru_model_forward.6
$region0: #{gru_model_forward.6}
  #allocation0 [shape = 'u32[]', space=smem, size = 0x4, offset = 0x4, fixed_abs, tag = 'smem constant byte address 0x4 - core index']
  #allocation1 [shape = 'u32[144,128]{1,0:T(1,128)}', space=vmem, size = 0x12000, scoped, tag = 'internal scratch']
  #allocation2 [shape = 'f32[2,32]{1,0:T(2,128)}', space=vmem, size = 0x400, scoped, tag = 'scratch operand']
  %s0 = inlined_call_operand.vmem [shape: bf16[8,2,96], index: 0, kind: input, shape index: {}]
  %s1 = inlined_call_operand.vmem [shape: bf16[32,96], index: 1, kind: input, shape index: {}]
  %s2 = inlined_call_operand.vmem [shape: f32[1,96], index: 2, kind: input, shape index: {}]
  %s3 = inlined_call_operand.vmem [shape: f32[8,2,32], index: 3, kind: output, shape index: {}]
  %s4 = sld [smem:[#allocation0]]
  $region26: #{gru_model_forward.6} parent=0
    _
  %s6 = ssub.s32 1, %s4
  %s7 = scalar_select 0, %s6, %s4
  // Predicated region
  $region2: #{gru_model_forward.6} parent=0 // pred_check
    _
  $region3: #{gru_model_forward.6} parent=0 // pred_check_branch
    %9 = sbr.rel (0) target = $region5
  $region4: #{gru_model_forward.6} parent=0 // pred_region
    _
  $region5: #{gru_model_forward.6} parent=0 // pred_fallthru
    _
  // Predicated region
  $region6: #{gru_model_forward.6} parent=0 // pred_check
    _
  $region7: #{gru_model_forward.6} parent=0 // pred_check_branch
    %11 = sbr.rel (0) target = $region9
  $region8: #{gru_model_forward.6} parent=0 // pred_region
    _
  $region9: #{gru_model_forward.6} parent=0 // pred_fallthru
    _
  // Predicated region
  $region10: #{gru_model_forward.6} parent=0 // pred_check
    _
  $region11: #{gru_model_forward.6} parent=0 // pred_check_branch
    %13 = sbr.rel (0) target = $region13
  $region12: #{gru_model_forward.6} parent=0 // pred_region
    _
  $region13: #{gru_model_forward.6} parent=0 // pred_fallthru
    _
  %p15 = scmp.eq.s32.totalorder 0, 0
  // Predicated region
  $region14: #{gru_model_forward.6} parent=0 // pred_check
    %p16 = pneg %p15
  $region15: #{gru_model_forward.6} parent=0 // pred_check_branch
    %18 = sbr.rel (%p16) target = $region17
  $region16: #{gru_model_forward.6} parent=0 // pred_region
    %vm19 = vcmask 254976
    %20 = vst.msk [vmem:[#allocation2] sm:$0x3] %vm19, 0.0
  $region17: #{gru_model_forward.6} parent=0 // pred_fallthru
    _
  %v21 = vld [vmem:[%s1] sm:$0xf]
  %v22 = vld [vmem:[%s1 + $0x4] sm:$0xf]
  %v23 = vld [vmem:[%s1 + $0x8] sm:$0xf]
  %v24 = vld [vmem:[%s1 + $0xc] sm:$0xf]
  %v25 = vld [vmem:[%s2] sm:$0x1]
  %v27 = vlaneseq
  %v28 = vshrl.u32 %v27, 7
  %v29 = vsub.s32 0, %v28
  %v30 = vrot.slane %v25, %v29
  %v32 = vld [vmem:[#allocation2] sm:$0x3]
  %v33 = vld [vmem:[%s0] sm:$0x1]
  %v34 = vunpack.c.l.bf16 %v33
  %v35 = vpack.c.bf16 %v32, %v32
  %v40 = vunpack.c.l.b16 %v21
  %v41 = vunpack.c.l.b16 %v22
  %v42 = vunpack.c.l.b16 %v23
  %v43 = vunpack.c.l.b16 %v24
  %v44 = vpack.c.b16 %v41, %v40
  %v45 = vpack.c.b16 %v43, %v42
  %vm48 = vcmask 261120
  %v50 = vsel %vm48, %v35, 0
  %52 = vmatprep.subr.bf16.mxu0 0
  %53 = vmatpush1.bf16.msra.mxu0 %v44
  %54 = vmatprep.subr.bf16.mxu0 0
  %55 = vmatpush1.bf16.msra.mxu0 %v45
  %56 = vmatprep.subr.bf16.mxu0 0
  %57 = vmatpush1.bf16.msra.mxu0 0
  %58 = vmatprep.subr.bf16.mxu0 0
  %59 = vmatpush1.bf16.msra.mxu0 0
  %60 = vmatprep.subr.bf16.mxu0 0
  %61 = vmatpush1.bf16.msra.mxu0 0
  %62 = vmatprep.subr.bf16.mxu0 0
  %63 = vmatpush1.bf16.msra.mxu0 0
  %64 = vmatprep.subr.bf16.mxu0 0
  %65 = vmatpush1.bf16.msra.mxu0 0
  %66 = vmatprep.subr.bf16.mxu0 0
  %67 = vmatpush1.bf16.msra.mxu0 0
  %68 = vmatprep.subr.bf16.mxu0 0
  %69 = vmatpush1.bf16.msra.mxu0 0
  %70 = vmatprep.subr.bf16.mxu0 0
  %71 = vmatpush1.bf16.msra.mxu0 0
  %72 = vmatprep.subr.bf16.mxu0 0
  %73 = vmatpush1.bf16.msra.mxu0 0
  %74 = vmatprep.subr.bf16.mxu0 0
  %75 = vmatpush1.bf16.msra.mxu0 0
  %76 = vmatprep.subr.bf16.mxu0 0
  %77 = vmatpush1.bf16.msra.mxu0 0
  %78 = vmatprep.subr.bf16.mxu0 0
  %79 = vmatpush1.bf16.msra.mxu0 0
  %80 = vmatprep.subr.bf16.mxu0 0
  %81 = vmatpush1.bf16.msra.mxu0 0
  %82 = vmatprep.subr.bf16.mxu0 0
  %83 = vmatpush1.bf16.msra.mxu0 0
  %84 = vmatprep.mubr.bf16.mxu0 0
  %85 = vmatmul.mubr.bf16.gmra.mrb[0].mxu0 %v50
  %v86 = vpop.f32.mrb[0].mxu0
  %v87 = vadd.f32 %v30, %v86
  %v88 = vpop.f32.mrb[0].mxu0
  %v89 = vpop.f32.mrb[0].mxu0
  %v90 = vpop.f32.mrb[0].mxu0
  %91 = vdwg.mxu0
  %v92 = vadd.f32 %v34, %v87
  %v93 = vxor.u32 %v92, 2147483648
  %v94 = vmul.f32 %v93, 1.442695
  %v95 = vpow.pop %v94
  %v96 = vadd.f32 %v95, 1.0
  %v97 = vrcp.pop %v96
  %v98 = vmul.f32 1.0, %v97
  %v101 = vunpack.c.l.s4 1983009808
  %v102 = vunpack.c.0.s8 %v101
  %v103 = vlaneseq
  %v104 = vshrl.u32 %v103, 7
  %v105 = vsub.s32 %v102, %v104
  %v106 = vrot.slane %v87, %v105
  %107 = vrot.lane.b32.xlu0 %v106, 64
  %v108 = vpop.permute.xlu0 %107
  %v110 = vmul.f32 %v98, %v108
  %112 = vrot.lane.b32.xlu0 %v110, 64
  %v113 = vpop.permute.xlu0 %112
  %v115 = vadd.f32 %v34, %v113
  %v116 = vtanh.pop %v115
  %v119 = vunpack.c.l.s4 1983009808
  %v120 = vunpack.c.0.s8 %v119
  %v121 = vlaneseq
  %v122 = vshrl.u32 %v121, 7
  %v123 = vsub.s32 %v120, %v122
  %v124 = vrot.slane %v116, %v123
  %125 = vrot.lane.b32.xlu0 %v124, 64
  %v126 = vpop.permute.xlu0 %125
  %v128 = vsub.f32 %v32, %v126
  %v131 = vunpack.c.l.s4 1983009808
  %v132 = vunpack.c.0.s8 %v131
  %v133 = vlaneseq
  %v134 = vshrl.u32 %v133, 7
  %v135 = vsub.s32 %v132, %v134
  %v136 = vrot.slane %v128, %v135
  %137 = vrot.lane.b32.xlu0 %v136, 32
  %v138 = vpop.permute.xlu0 %137
  %v140 = vmul.f32 %v98, %v138
  %142 = vrot.lane.b32.xlu0 %v140, 32
  %v143 = vpop.permute.xlu0 %142
  %v145 = vadd.f32 %v116, %v143
  %v148 = vunpack.c.l.s4 1983009808
  %v149 = vunpack.c.0.s8 %v148
  %v150 = vlaneseq
  %v151 = vshrl.u32 %v150, 7
  %v152 = vsub.s32 %v149, %v151
  %v153 = vrot.slane %v145, %v152
  %154 = vrot.lane.b32.xlu0 %v153, 64
  %v155 = vpop.permute.xlu0 %154
  %vm157 = vcmask 254976
  %158 = vst.msk [vmem:[%s3] sm:$0x3] %vm157, %v155
  %s159 = scalar_lea.vmem %s0, 1
  %v160 = vld [vmem:[%s159] sm:$0x1]
  %v161 = vunpack.c.l.bf16 %v160
  %v162 = vpack.c.bf16 %v145, %v145
  %164 = vrot.lane.b32.xlu0 %v162, 64
  %v165 = vpop.permute.xlu0 %164
  %v167 = vsel %vm48, %v165, 0
  %169 = vmatprep.subr.bf16.mxu0 0
  %170 = vmatpush1.bf16.msra.mxu0 %v44
  %171 = vmatprep.subr.bf16.mxu0 0
  %172 = vmatpush1.bf16.msra.mxu0 %v45
  %173 = vmatprep.subr.bf16.mxu0 0
  %174 = vmatpush1.bf16.msra.mxu0 0
  %175 = vmatprep.subr.bf16.mxu0 0
  %176 = vmatpush1.bf16.msra.mxu0 0
  %177 = vmatprep.subr.bf16.mxu0 0
  %178 = vmatpush1.bf16.msra.mxu0 0
  %179 = vmatprep.subr.bf16.mxu0 0
  %180 = vmatpush1.bf16.msra.mxu0 0
  %181 = vmatprep.subr.bf16.mxu0 0
  %182 = vmatpush1.bf16.msra.mxu0 0
  %183 = vmatprep.subr.bf16.mxu0 0
  %184 = vmatpush1.bf16.msra.mxu0 0
  %185 = vmatprep.subr.bf16.mxu0 0
  %186 = vmatpush1.bf16.msra.mxu0 0
  %187 = vmatprep.subr.bf16.mxu0 0
  %188 = vmatpush1.bf16.msra.mxu0 0
  %189 = vmatprep.subr.bf16.mxu0 0
  %190 = vmatpush1.bf16.msra.mxu0 0
  %191 = vmatprep.subr.bf16.mxu0 0
  %192 = vmatpush1.bf16.msra.mxu0 0
  %193 = vmatprep.subr.bf16.mxu0 0
  %194 = vmatpush1.bf16.msra.mxu0 0
  %195 = vmatprep.subr.bf16.mxu0 0
  %196 = vmatpush1.bf16.msra.mxu0 0
  %197 = vmatprep.subr.bf16.mxu0 0
  %198 = vmatpush1.bf16.msra.mxu0 0
  %199 = vmatprep.subr.bf16.mxu0 0
  %200 = vmatpush1.bf16.msra.mxu0 0
  %201 = vmatprep.mubr.bf16.mxu0 0
  %202 = vmatmul.mubr.bf16.gmra.mrb[0].mxu0 %v167
  %v203 = vpop.f32.mrb[0].mxu0
  %v204 = vadd.f32 %v30, %v203
  %v205 = vpop.f32.mrb[0].mxu0
  %v206 = vpop.f32.mrb[0].mxu0
  %v207 = vpop.f32.mrb[0].mxu0
  %208 = vdwg.mxu0
  %v209 = vadd.f32 %v161, %v204
  %v210 = vxor.u32 %v209, 2147483648
  %v211 = vmul.f32 %v210, 1.442695
  %v212 = vpow.pop %v211
  %v213 = vadd.f32 %v212, 1.0
  %v214 = vrcp.pop %v213
  %v215 = vmul.f32 1.0, %v214
  %v218 = vunpack.c.l.s4 1983009808
  %v219 = vunpack.c.0.s8 %v218
  %v220 = vlaneseq
  %v221 = vshrl.u32 %v220, 7
  %v222 = vsub.s32 %v219, %v221
  %v223 = vrot.slane %v204, %v222
  %224 = vrot.lane.b32.xlu0 %v223, 64
  %v225 = vpop.permute.xlu0 %224
  %v227 = vmul.f32 %v215, %v225
  %229 = vrot.lane.b32.xlu0 %v227, 64
  %v230 = vpop.permute.xlu0 %229
  %v232 = vadd.f32 %v161, %v230
  %v233 = vtanh.pop %v232
  %v234 = vsub.f32 %v145, %v233
  %236 = vrot.lane.b32.xlu0 %v234, 96
  %v237 = vpop.permute.xlu0 %236
  %v239 = vmul.f32 %v215, %v237
  %241 = vrot.lane.b32.xlu0 %v239, 32
  %v242 = vpop.permute.xlu0 %241
  %v244 = vadd.f32 %v233, %v242
  %v247 = vunpack.c.l.s4 1983009808
  %v248 = vunpack.c.0.s8 %v247
  %v249 = vlaneseq
  %v250 = vshrl.u32 %v249, 7
  %v251 = vsub.s32 %v248, %v250
  %v252 = vrot.slane %v244, %v251
  %253 = vrot.lane.b32.xlu0 %v252, 64
  %v254 = vpop.permute.xlu0 %253
  %s256 = scalar_lea.vmem %s3, 2
  %257 = vst.msk [vmem:[%s256] sm:$0x3] %vm157, %v254
  %s258 = scalar_lea.vmem %s0, 2
  %v259 = vld [vmem:[%s258] sm:$0x1]
  %v260 = vunpack.c.l.bf16 %v259
  %v261 = vpack.c.bf16 %v244, %v244
  %263 = vrot.lane.b32.xlu0 %v261, 64
  %v264 = vpop.permute.xlu0 %263
  %v266 = vsel %vm48, %v264, 0
  %268 = vmatprep.subr.bf16.mxu0 0
  %269 = vmatpush1.bf16.msra.mxu0 %v44
  %270 = vmatprep.subr.bf16.mxu0 0
  %271 = vmatpush1.bf16.msra.mxu0 %v45
  %272 = vmatprep.subr.bf16.mxu0 0
  %273 = vmatpush1.bf16.msra.mxu0 0
  %274 = vmatprep.subr.bf16.mxu0 0
  %275 = vmatpush1.bf16.msra.mxu0 0
  %276 = vmatprep.subr.bf16.mxu0 0
  %277 = vmatpush1.bf16.msra.mxu0 0
  %278 = vmatprep.subr.bf16.mxu0 0
  %279 = vmatpush1.bf16.msra.mxu0 0
  %280 = vmatprep.subr.bf16.mxu0 0
  %281 = vmatpush1.bf16.msra.mxu0 0
  %282 = vmatprep.subr.bf16.mxu0 0
  %283 = vmatpush1.bf16.msra.mxu0 0
  %284 = vmatprep.subr.bf16.mxu0 0
  %285 = vmatpush1.bf16.msra.mxu0 0
  %286 = vmatprep.subr.bf16.mxu0 0
  %287 = vmatpush1.bf16.msra.mxu0 0
  %288 = vmatprep.subr.bf16.mxu0 0
  %289 = vmatpush1.bf16.msra.mxu0 0
  %290 = vmatprep.subr.bf16.mxu0 0
  %291 = vmatpush1.bf16.msra.mxu0 0
  %292 = vmatprep.subr.bf16.mxu0 0
  %293 = vmatpush1.bf16.msra.mxu0 0
  %294 = vmatprep.subr.bf16.mxu0 0
  %295 = vmatpush1.bf16.msra.mxu0 0
  %296 = vmatprep.subr.bf16.mxu0 0
  %297 = vmatpush1.bf16.msra.mxu0 0
  %298 = vmatprep.subr.bf16.mxu0 0
  %299 = vmatpush1.bf16.msra.mxu0 0
  %300 = vmatprep.mubr.bf16.mxu0 0
  %301 = vmatmul.mubr.bf16.gmra.mrb[0].mxu0 %v266
  %v302 = vpop.f32.mrb[0].mxu0
  %v303 = vadd.f32 %v30, %v302
  %v304 = vpop.f32.mrb[0].mxu0
  %v305 = vpop.f32.mrb[0].mxu0
  %v306 = vpop.f32.mrb[0].mxu0
  %307 = vdwg.mxu0
  %v308 = vadd.f32 %v260, %v303
  %v309 = vxor.u32 %v308, 2147483648
  %v310 = vmul.f32 %v309, 1.442695
  %v311 = vpow.pop %v310
  %v312 = vadd.f32 %v311, 1.0
  %v313 = vrcp.pop %v312
  %v314 = vmul.f32 1.0, %v313
  %v317 = vunpack.c.l.s4 1983009808
  %v318 = vunpack.c.0.s8 %v317
  %v319 = vlaneseq
  %v320 = vshrl.u32 %v319, 7
  %v321 = vsub.s32 %v318, %v320
  %v322 = vrot.slane %v303, %v321
  %323 = vrot.lane.b32.xlu0 %v322, 64
  %v324 = vpop.permute.xlu0 %323
  %v326 = vmul.f32 %v314, %v324
  %328 = vrot.lane.b32.xlu0 %v326, 64
  %v329 = vpop.permute.xlu0 %328
  %v331 = vadd.f32 %v260, %v329
  %v332 = vtanh.pop %v331
  %v333 = vsub.f32 %v244, %v332
  %335 = vrot.lane.b32.xlu0 %v333, 96
  %v336 = vpop.permute.xlu0 %335
  %v338 = vmul.f32 %v314, %v336
  %340 = vrot.lane.b32.xlu0 %v338, 32
  %v341 = vpop.permute.xlu0 %340
  %v343 = vadd.f32 %v332, %v341
  %v346 = vunpack.c.l.s4 1983009808
  %v347 = vunpack.c.0.s8 %v346
  %v348 = vlaneseq
  %v349 = vshrl.u32 %v348, 7
  %v350 = vsub.s32 %v347, %v349
  %v351 = vrot.slane %v343, %v350
  %352 = vrot.lane.b32.xlu0 %v351, 64
  %v353 = vpop.permute.xlu0 %352
  %s355 = scalar_lea.vmem %s3, 4
  %356 = vst.msk [vmem:[%s355] sm:$0x3] %vm157, %v353
  %s357 = scalar_lea.vmem %s0, 3
  %v358 = vld [vmem:[%s357] sm:$0x1]
  %v359 = vunpack.c.l.bf16 %v358
  %v360 = vpack.c.bf16 %v343, %v343
  %362 = vrot.lane.b32.xlu0 %v360, 64
  %v363 = vpop.permute.xlu0 %362
  %v365 = vsel %vm48, %v363, 0
  %367 = vmatprep.subr.bf16.mxu0 0
  %368 = vmatpush1.bf16.msra.mxu0 %v44
  %369 = vmatprep.subr.bf16.mxu0 0
  %370 = vmatpush1.bf16.msra.mxu0 %v45
  %371 = vmatprep.subr.bf16.mxu0 0
  %372 = vmatpush1.bf16.msra.mxu0 0
  %373 = vmatprep.subr.bf16.mxu0 0
  %374 = vmatpush1.bf16.msra.mxu0 0
  %375 = vmatprep.subr.bf16.mxu0 0
  %376 = vmatpush1.bf16.msra.mxu0 0
  %377 = vmatprep.subr.bf16.mxu0 0
  %378 = vmatpush1.bf16.msra.mxu0 0
  %379 = vmatprep.subr.bf16.mxu0 0
  %380 = vmatpush1.bf16.msra.mxu0 0
  %381 = vmatprep.subr.bf16.mxu0 0
  %382 = vmatpush1.bf16.msra.mxu0 0
  %383 = vmatprep.subr.bf16.mxu0 0
  %384 = vmatpush1.bf16.msra.mxu0 0
  %385 = vmatprep.subr.bf16.mxu0 0
  %386 = vmatpush1.bf16.msra.mxu0 0
  %387 = vmatprep.subr.bf16.mxu0 0
  %388 = vmatpush1.bf16.msra.mxu0 0
  %389 = vmatprep.subr.bf16.mxu0 0
  %390 = vmatpush1.bf16.msra.mxu0 0
  %391 = vmatprep.subr.bf16.mxu0 0
  %392 = vmatpush1.bf16.msra.mxu0 0
  %393 = vmatprep.subr.bf16.mxu0 0
  %394 = vmatpush1.bf16.msra.mxu0 0
  %395 = vmatprep.subr.bf16.mxu0 0
  %396 = vmatpush1.bf16.msra.mxu0 0
  %397 = vmatprep.subr.bf16.mxu0 0
  %398 = vmatpush1.bf16.msra.mxu0 0
  %399 = vmatprep.mubr.bf16.mxu0 0
  %400 = vmatmul.mubr.bf16.gmra.mrb[0].mxu0 %v365
  %v401 = vpop.f32.mrb[0].mxu0
  %v402 = vadd.f32 %v30, %v401
  %v403 = vpop.f32.mrb[0].mxu0
  %v404 = vpop.f32.mrb[0].mxu0
  %v405 = vpop.f32.mrb[0].mxu0
  %406 = vdwg.mxu0
  %v407 = vadd.f32 %v359, %v402
  %v408 = vxor.u32 %v407, 2147483648
  %v409 = vmul.f32 %v408, 1.442695
  %v410 = vpow.pop %v409
  %v411 = vadd.f32 %v410, 1.0
  %v412 = vrcp.pop %v411
  %v413 = vmul.f32 1.0, %v412
  %v416 = vunpack.c.l.s4 1983009808
  %v417 = vunpack.c.0.s8 %v416
  %v418 = vlaneseq
  %v419 = vshrl.u32 %v418, 7
  %v420 = vsub.s32 %v417, %v419
  %v421 = vrot.slane %v402, %v420
  %422 = vrot.lane.b32.xlu0 %v421, 64
  %v423 = vpop.permute.xlu0 %422
  %v425 = vmul.f32 %v413, %v423
  %427 = vrot.lane.b32.xlu0 %v425, 64
  %v428 = vpop.permute.xlu0 %427
  %v430 = vadd.f32 %v359, %v428
  %v431 = vtanh.pop %v430
  %v432 = vsub.f32 %v343, %v431
  %434 = vrot.lane.b32.xlu0 %v432, 96
  %v435 = vpop.permute.xlu0 %434
  %v437 = vmul.f32 %v413, %v435
  %439 = vrot.lane.b32.xlu0 %v437, 32
  %v440 = vpop.permute.xlu0 %439
  %v442 = vadd.f32 %v431, %v440
  %v445 = vunpack.c.l.s4 1983009808
  %v446 = vunpack.c.0.s8 %v445
  %v447 = vlaneseq
  %v448 = vshrl.u32 %v447, 7
  %v449 = vsub.s32 %v446, %v448
  %v450 = vrot.slane %v442, %v449
  %451 = vrot.lane.b32.xlu0 %v450, 64
  %v452 = vpop.permute.xlu0 %451
  %s454 = scalar_lea.vmem %s3, 6
  %455 = vst.msk [vmem:[%s454] sm:$0x3] %vm157, %v452
  %s456 = scalar_lea.vmem %s0, 4
  %v457 = vld [vmem:[%s456] sm:$0x1]
  %v458 = vunpack.c.l.bf16 %v457
  %v459 = vpack.c.bf16 %v442, %v442
  %461 = vrot.lane.b32.xlu0 %v459, 64
  %v462 = vpop.permute.xlu0 %461
  %v464 = vsel %vm48, %v462, 0
  %466 = vmatprep.subr.bf16.mxu0 0
  %467 = vmatpush1.bf16.msra.mxu0 %v44
  %468 = vmatprep.subr.bf16.mxu0 0
  %469 = vmatpush1.bf16.msra.mxu0 %v45
  %470 = vmatprep.subr.bf16.mxu0 0
  %471 = vmatpush1.bf16.msra.mxu0 0
  %472 = vmatprep.subr.bf16.mxu0 0
  %473 = vmatpush1.bf16.msra.mxu0 0
  %474 = vmatprep.subr.bf16.mxu0 0
  %475 = vmatpush1.bf16.msra.mxu0 0
  %476 = vmatprep.subr.bf16.mxu0 0
  %477 = vmatpush1.bf16.msra.mxu0 0
  %478 = vmatprep.subr.bf16.mxu0 0
  %479 = vmatpush1.bf16.msra.mxu0 0
  %480 = vmatprep.subr.bf16.mxu0 0
  %481 = vmatpush1.bf16.msra.mxu0 0
  %482 = vmatprep.subr.bf16.mxu0 0
  %483 = vmatpush1.bf16.msra.mxu0 0
  %484 = vmatprep.subr.bf16.mxu0 0
  %485 = vmatpush1.bf16.msra.mxu0 0
  %486 = vmatprep.subr.bf16.mxu0 0
  %487 = vmatpush1.bf16.msra.mxu0 0
  %488 = vmatprep.subr.bf16.mxu0 0
  %489 = vmatpush1.bf16.msra.mxu0 0
  %490 = vmatprep.subr.bf16.mxu0 0
  %491 = vmatpush1.bf16.msra.mxu0 0
  %492 = vmatprep.subr.bf16.mxu0 0
  %493 = vmatpush1.bf16.msra.mxu0 0
  %494 = vmatprep.subr.bf16.mxu0 0
  %495 = vmatpush1.bf16.msra.mxu0 0
  %496 = vmatprep.subr.bf16.mxu0 0
  %497 = vmatpush1.bf16.msra.mxu0 0
  %498 = vmatprep.mubr.bf16.mxu0 0
  %499 = vmatmul.mubr.bf16.gmra.mrb[0].mxu0 %v464
  %v500 = vpop.f32.mrb[0].mxu0
  %v501 = vadd.f32 %v30, %v500
  %v502 = vpop.f32.mrb[0].mxu0
  %v503 = vpop.f32.mrb[0].mxu0
  %v504 = vpop.f32.mrb[0].mxu0
  %505 = vdwg.mxu0
  %v506 = vadd.f32 %v458, %v501
  %v507 = vxor.u32 %v506, 2147483648
  %v508 = vmul.f32 %v507, 1.442695
  %v509 = vpow.pop %v508
  %v510 = vadd.f32 %v509, 1.0
  %v511 = vrcp.pop %v510
  %v512 = vmul.f32 1.0, %v511
  %v515 = vunpack.c.l.s4 1983009808
  %v516 = vunpack.c.0.s8 %v515
  %v517 = vlaneseq
  %v518 = vshrl.u32 %v517, 7
  %v519 = vsub.s32 %v516, %v518
  %v520 = vrot.slane %v501, %v519
  %521 = vrot.lane.b32.xlu0 %v520, 64
  %v522 = vpop.permute.xlu0 %521
  %v524 = vmul.f32 %v512, %v522
  %526 = vrot.lane.b32.xlu0 %v524, 64
  %v527 = vpop.permute.xlu0 %526
  %v529 = vadd.f32 %v458, %v527
  %v530 = vtanh.pop %v529
  %v531 = vsub.f32 %v442, %v530
  %533 = vrot.lane.b32.xlu0 %v531, 96
  %v534 = vpop.permute.xlu0 %533
  %v536 = vmul.f32 %v512, %v534
  %538 = vrot.lane.b32.xlu0 %v536, 32
  %v539 = vpop.permute.xlu0 %538
  %v541 = vadd.f32 %v530, %v539
  %v544 = vunpack.c.l.s4 1983009808
  %v545 = vunpack.c.0.s8 %v544
  %v546 = vlaneseq
  %v547 = vshrl.u32 %v546, 7
  %v548 = vsub.s32 %v545, %v547
  %v549 = vrot.slane %v541, %v548
  %550 = vrot.lane.b32.xlu0 %v549, 64
  %v551 = vpop.permute.xlu0 %550
  %s553 = scalar_lea.vmem %s3, 8
  %554 = vst.msk [vmem:[%s553] sm:$0x3] %vm157, %v551
  %s555 = scalar_lea.vmem %s0, 5
  %v556 = vld [vmem:[%s555] sm:$0x1]
  %v557 = vunpack.c.l.bf16 %v556
  %v558 = vpack.c.bf16 %v541, %v541
  %560 = vrot.lane.b32.xlu0 %v558, 64
  %v561 = vpop.permute.xlu0 %560
  %v563 = vsel %vm48, %v561, 0
  %565 = vmatprep.subr.bf16.mxu0 0
  %566 = vmatpush1.bf16.msra.mxu0 %v44
  %567 = vmatprep.subr.bf16.mxu0 0
  %568 = vmatpush1.bf16.msra.mxu0 %v45
  %569 = vmatprep.subr.bf16.mxu0 0
  %570 = vmatpush1.bf16.msra.mxu0 0
  %571 = vmatprep.subr.bf16.mxu0 0
  %572 = vmatpush1.bf16.msra.mxu0 0
  %573 = vmatprep.subr.bf16.mxu0 0
  %574 = vmatpush1.bf16.msra.mxu0 0
  %575 = vmatprep.subr.bf16.mxu0 0
  %576 = vmatpush1.bf16.msra.mxu0 0
  %577 = vmatprep.subr.bf16.mxu0 0
  %578 = vmatpush1.bf16.msra.mxu0 0
  %579 = vmatprep.subr.bf16.mxu0 0
  %580 = vmatpush1.bf16.msra.mxu0 0
  %581 = vmatprep.subr.bf16.mxu0 0
  %582 = vmatpush1.bf16.msra.mxu0 0
  %583 = vmatprep.subr.bf16.mxu0 0
  %584 = vmatpush1.bf16.msra.mxu0 0
  %585 = vmatprep.subr.bf16.mxu0 0
  %586 = vmatpush1.bf16.msra.mxu0 0
  %587 = vmatprep.subr.bf16.mxu0 0
  %588 = vmatpush1.bf16.msra.mxu0 0
  %589 = vmatprep.subr.bf16.mxu0 0
  %590 = vmatpush1.bf16.msra.mxu0 0
  %591 = vmatprep.subr.bf16.mxu0 0
  %592 = vmatpush1.bf16.msra.mxu0 0
  %593 = vmatprep.subr.bf16.mxu0 0
  %594 = vmatpush1.bf16.msra.mxu0 0
  %595 = vmatprep.subr.bf16.mxu0 0
  %596 = vmatpush1.bf16.msra.mxu0 0
  %597 = vmatprep.mubr.bf16.mxu0 0
  %598 = vmatmul.mubr.bf16.gmra.mrb[0].mxu0 %v563
  %v599 = vpop.f32.mrb[0].mxu0
  %v600 = vadd.f32 %v30, %v599
  %v601 = vpop.f32.mrb[0].mxu0
  %v602 = vpop.f32.mrb[0].mxu0
  %v603 = vpop.f32.mrb[0].mxu0
  %604 = vdwg.mxu0
  %v605 = vadd.f32 %v557, %v600
  %v606 = vxor.u32 %v605, 2147483648
  %v607 = vmul.f32 %v606, 1.442695
  %v608 = vpow.pop %v607
  %v609 = vadd.f32 %v608, 1.0
  %v610 = vrcp.pop %v609
  %v611 = vmul.f32 1.0, %v610
  %v614 = vunpack.c.l.s4 1983009808
  %v615 = vunpack.c.0.s8 %v614
  %v616 = vlaneseq
  %v617 = vshrl.u32 %v616, 7
  %v618 = vsub.s32 %v615, %v617
  %v619 = vrot.slane %v600, %v618
  %620 = vrot.lane.b32.xlu0 %v619, 64
  %v621 = vpop.permute.xlu0 %620
  %v623 = vmul.f32 %v611, %v621
  %625 = vrot.lane.b32.xlu0 %v623, 64
  %v626 = vpop.permute.xlu0 %625
  %v628 = vadd.f32 %v557, %v626
  %v629 = vtanh.pop %v628
  %v630 = vsub.f32 %v541, %v629
  %632 = vrot.lane.b32.xlu0 %v630, 96
  %v633 = vpop.permute.xlu0 %632
  %v635 = vmul.f32 %v611, %v633
  %637 = vrot.lane.b32.xlu0 %v635, 32
  %v638 = vpop.permute.xlu0 %637
  %v640 = vadd.f32 %v629, %v638
  %v643 = vunpack.c.l.s4 1983009808
  %v644 = vunpack.c.0.s8 %v643
  %v645 = vlaneseq
  %v646 = vshrl.u32 %v645, 7
  %v647 = vsub.s32 %v644, %v646
  %v648 = vrot.slane %v640, %v647
  %649 = vrot.lane.b32.xlu0 %v648, 64
  %v650 = vpop.permute.xlu0 %649
  %s652 = scalar_lea.vmem %s3, 10
  %653 = vst.msk [vmem:[%s652] sm:$0x3] %vm157, %v650
  %s654 = scalar_lea.vmem %s0, 6
  %v655 = vld [vmem:[%s654] sm:$0x1]
  %v656 = vunpack.c.l.bf16 %v655
  %v657 = vpack.c.bf16 %v640, %v640
  %659 = vrot.lane.b32.xlu0 %v657, 64
  %v660 = vpop.permute.xlu0 %659
  %v662 = vsel %vm48, %v660, 0
  %664 = vmatprep.subr.bf16.mxu0 0
  %665 = vmatpush1.bf16.msra.mxu0 %v44
  %666 = vmatprep.subr.bf16.mxu0 0
  %667 = vmatpush1.bf16.msra.mxu0 %v45
  %668 = vmatprep.subr.bf16.mxu0 0
  %669 = vmatpush1.bf16.msra.mxu0 0
  %670 = vmatprep.subr.bf16.mxu0 0
  %671 = vmatpush1.bf16.msra.mxu0 0
  %672 = vmatprep.subr.bf16.mxu0 0
  %673 = vmatpush1.bf16.msra.mxu0 0
  %674 = vmatprep.subr.bf16.mxu0 0
  %675 = vmatpush1.bf16.msra.mxu0 0
  %676 = vmatprep.subr.bf16.mxu0 0
  %677 = vmatpush1.bf16.msra.mxu0 0
  %678 = vmatprep.subr.bf16.mxu0 0
  %679 = vmatpush1.bf16.msra.mxu0 0
  %680 = vmatprep.subr.bf16.mxu0 0
  %681 = vmatpush1.bf16.msra.mxu0 0
  %682 = vmatprep.subr.bf16.mxu0 0
  %683 = vmatpush1.bf16.msra.mxu0 0
  %684 = vmatprep.subr.bf16.mxu0 0
  %685 = vmatpush1.bf16.msra.mxu0 0
  %686 = vmatprep.subr.bf16.mxu0 0
  %687 = vmatpush1.bf16.msra.mxu0 0
  %688 = vmatprep.subr.bf16.mxu0 0
  %689 = vmatpush1.bf16.msra.mxu0 0
  %690 = vmatprep.subr.bf16.mxu0 0
  %691 = vmatpush1.bf16.msra.mxu0 0
  %692 = vmatprep.subr.bf16.mxu0 0
  %693 = vmatpush1.bf16.msra.mxu0 0
  %694 = vmatprep.subr.bf16.mxu0 0
  %695 = vmatpush1.bf16.msra.mxu0 0
  %696 = vmatprep.mubr.bf16.mxu0 0
  %697 = vmatmul.mubr.bf16.gmra.mrb[0].mxu0 %v662
  %v698 = vpop.f32.mrb[0].mxu0
  %v699 = vadd.f32 %v30, %v698
  %v700 = vpop.f32.mrb[0].mxu0
  %v701 = vpop.f32.mrb[0].mxu0
  %v702 = vpop.f32.mrb[0].mxu0
  %703 = vdwg.mxu0
  %v704 = vadd.f32 %v656, %v699
  %v705 = vxor.u32 %v704, 2147483648
  %v706 = vmul.f32 %v705, 1.442695
  %v707 = vpow.pop %v706
  %v708 = vadd.f32 %v707, 1.0
  %v709 = vrcp.pop %v708
  %v710 = vmul.f32 1.0, %v709
  %v713 = vunpack.c.l.s4 1983009808
  %v714 = vunpack.c.0.s8 %v713
  %v715 = vlaneseq
  %v716 = vshrl.u32 %v715, 7
  %v717 = vsub.s32 %v714, %v716
  %v718 = vrot.slane %v699, %v717
  %719 = vrot.lane.b32.xlu0 %v718, 64
  %v720 = vpop.permute.xlu0 %719
  %v722 = vmul.f32 %v710, %v720
  %724 = vrot.lane.b32.xlu0 %v722, 64
  %v725 = vpop.permute.xlu0 %724
  %v727 = vadd.f32 %v656, %v725
  %v728 = vtanh.pop %v727
  %v729 = vsub.f32 %v640, %v728
  %731 = vrot.lane.b32.xlu0 %v729, 96
  %v732 = vpop.permute.xlu0 %731
  %v734 = vmul.f32 %v710, %v732
  %736 = vrot.lane.b32.xlu0 %v734, 32
  %v737 = vpop.permute.xlu0 %736
  %v739 = vadd.f32 %v728, %v737
  %v742 = vunpack.c.l.s4 1983009808
  %v743 = vunpack.c.0.s8 %v742
  %v744 = vlaneseq
  %v745 = vshrl.u32 %v744, 7
  %v746 = vsub.s32 %v743, %v745
  %v747 = vrot.slane %v739, %v746
  %748 = vrot.lane.b32.xlu0 %v747, 64
  %v749 = vpop.permute.xlu0 %748
  %s751 = scalar_lea.vmem %s3, 12
  %752 = vst.msk [vmem:[%s751] sm:$0x3] %vm157, %v749
  %s753 = scalar_lea.vmem %s0, 7
  %v754 = vld [vmem:[%s753] sm:$0x1]
  %v755 = vunpack.c.l.bf16 %v754
  %v756 = vpack.c.bf16 %v739, %v739
  %758 = vrot.lane.b32.xlu0 %v756, 64
  %v759 = vpop.permute.xlu0 %758
  %v761 = vsel %vm48, %v759, 0
  %763 = vmatprep.subr.bf16.mxu0 0
  %764 = vmatpush1.bf16.msra.mxu0 %v44
  %765 = vmatprep.subr.bf16.mxu0 0
  %766 = vmatpush1.bf16.msra.mxu0 %v45
  %767 = vmatprep.subr.bf16.mxu0 0
  %768 = vmatpush1.bf16.msra.mxu0 0
  %769 = vmatprep.subr.bf16.mxu0 0
  %770 = vmatpush1.bf16.msra.mxu0 0
  %771 = vmatprep.subr.bf16.mxu0 0
  %772 = vmatpush1.bf16.msra.mxu0 0
  %773 = vmatprep.subr.bf16.mxu0 0
  %774 = vmatpush1.bf16.msra.mxu0 0
  %775 = vmatprep.subr.bf16.mxu0 0
  %776 = vmatpush1.bf16.msra.mxu0 0
  %777 = vmatprep.subr.bf16.mxu0 0
  %778 = vmatpush1.bf16.msra.mxu0 0
  %779 = vmatprep.subr.bf16.mxu0 0
  %780 = vmatpush1.bf16.msra.mxu0 0
  %781 = vmatprep.subr.bf16.mxu0 0
  %782 = vmatpush1.bf16.msra.mxu0 0
  %783 = vmatprep.subr.bf16.mxu0 0
  %784 = vmatpush1.bf16.msra.mxu0 0
  %785 = vmatprep.subr.bf16.mxu0 0
  %786 = vmatpush1.bf16.msra.mxu0 0
  %787 = vmatprep.subr.bf16.mxu0 0
  %788 = vmatpush1.bf16.msra.mxu0 0
  %789 = vmatprep.subr.bf16.mxu0 0
  %790 = vmatpush1.bf16.msra.mxu0 0
  %791 = vmatprep.subr.bf16.mxu0 0
  %792 = vmatpush1.bf16.msra.mxu0 0
  %793 = vmatprep.subr.bf16.mxu0 0
  %794 = vmatpush1.bf16.msra.mxu0 0
  %795 = vmatprep.mubr.bf16.mxu0 0
  %796 = vmatmul.mubr.bf16.gmra.mrb[0].mxu0 %v761
  %v797 = vpop.f32.mrb[0].mxu0
  %v798 = vadd.f32 %v30, %v797
  %v799 = vpop.f32.mrb[0].mxu0
  %v800 = vpop.f32.mrb[0].mxu0
  %v801 = vpop.f32.mrb[0].mxu0
  %802 = vdwg.mxu0
  %v803 = vadd.f32 %v755, %v798
  %v804 = vxor.u32 %v803, 2147483648
  %v805 = vmul.f32 %v804, 1.442695
  %v806 = vpow.pop %v805
  %v807 = vadd.f32 %v806, 1.0
  %v808 = vrcp.pop %v807
  %v809 = vmul.f32 1.0, %v808
  %v812 = vunpack.c.l.s4 1983009808
  %v813 = vunpack.c.0.s8 %v812
  %v814 = vlaneseq
  %v815 = vshrl.u32 %v814, 7
  %v816 = vsub.s32 %v813, %v815
  %v817 = vrot.slane %v798, %v816
  %818 = vrot.lane.b32.xlu0 %v817, 64
  %v819 = vpop.permute.xlu0 %818
  %v821 = vmul.f32 %v809, %v819
  %823 = vrot.lane.b32.xlu0 %v821, 64
  %v824 = vpop.permute.xlu0 %823
  %v826 = vadd.f32 %v755, %v824
  %v827 = vtanh.pop %v826
  %v828 = vsub.f32 %v739, %v827
  %830 = vrot.lane.b32.xlu0 %v828, 96
  %v831 = vpop.permute.xlu0 %830
  %v833 = vmul.f32 %v809, %v831
  %835 = vrot.lane.b32.xlu0 %v833, 32
  %v836 = vpop.permute.xlu0 %835
  %v838 = vadd.f32 %v827, %v836
  %v841 = vunpack.c.l.s4 1983009808
  %v842 = vunpack.c.0.s8 %v841
  %v843 = vlaneseq
  %v844 = vshrl.u32 %v843, 7
  %v845 = vsub.s32 %v842, %v844
  %v846 = vrot.slane %v838, %v845
  %847 = vrot.lane.b32.xlu0 %v846, 64
  %v848 = vpop.permute.xlu0 %847
  %s850 = scalar_lea.vmem %s3, 14
  %851 = vst.msk [vmem:[%s850] sm:$0x3] %vm157, %v848
  %852 = vst.msk [vmem:[#allocation2] sm:$0x3] %vm157, %v848
  // Predicated region
  $region18: #{gru_model_forward.6} parent=0 // pred_check
    _
  $region19: #{gru_model_forward.6} parent=0 // pred_check_branch
    %854 = sbr.rel (0) target = $region21
  $region20: #{gru_model_forward.6} parent=0 // pred_region
    _
  $region21: #{gru_model_forward.6} parent=0 // pred_fallthru
    _
  // Predicated region
  $region22: #{gru_model_forward.6} parent=0 // pred_check
    _
  $region23: #{gru_model_forward.6} parent=0 // pred_check_branch
    %856 = sbr.rel (0) target = $region25
  $region24: #{gru_model_forward.6} parent=0 // pred_region
    _
  $region25: #{gru_model_forward.6} parent=0 // pred_fallthru
    _

</llo_original>
